<compile_context>
chip_gen: v5e
topology: v5e:2x2
jax: 0.10.0
libtpu: 0.0.40
codegen_flags: <defaults>
</compile_context>

<pallas_src>
import functools

import jax
import jax.numpy as jnp
from jax.experimental import pallas as pl
from jax.experimental.pallas import tpu as pltpu


def _bilstm_mlp_kernel(maxlen_ref, lens_ref, x2d_ref,
                       wih_ref, bih_ref, whh_ref,
                       w1_ref, b1_ref, w2_ref, b2_ref,
                       out_ref, *, inv_temp):
    f32 = jnp.float32
    B = lens_ref.shape[0]
    TB, E = x2d_ref.shape
    T = TB // B

    lens = lens_ref[...]              # (B, 1) int32
    maxlen = maxlen_ref[0]            # scalar int32 == max(lengths)

    # ---- hoisted input projection: ONE MXU matmul for all T steps, both dirs.
    # Columns: [i,f,g,o]_fwd (4E) | [i,f,g,o]_bwd (4E)  (PyTorch gate order).
    gates_in = (jnp.dot(x2d_ref[...], wih_ref[...],
                        preferred_element_type=f32)
                + bih_ref[...])                                   # (T*B, 8E) f32

    # Static per-step slices (the time loop is fully unrolled, T is static).
    gin_f = [gates_in[t * B:(t + 1) * B, 0:4 * E] for t in range(T)]       # (B, 4E)
    gin_b = [gates_in[t * B:(t + 1) * B, 4 * E:8 * E] for t in range(T)]   # (B, 4E)

    whh = whh_ref[...]                # (2E, 8E) bf16 block-diagonal recurrent weights

    zeros_be = jnp.zeros((B, E), f32)
    neg_inf = jnp.full((B, E), -jnp.inf, f32)
    hf = zeros_be; cf = zeros_be
    hb = zeros_be; cb = zeros_be
    mxf = neg_inf; mxb = neg_inf      # running max over VALID steps only

    for t in range(T):                # fully unrolled; state carried in vregs
        tb = T - 1 - t

        # Single fused recurrent MXU push for both directions.
        hcat = jnp.concatenate([hf, hb], axis=1).astype(jnp.bfloat16)      # (B, 2E)
        gh = jnp.dot(hcat, whh, preferred_element_type=f32)                # (B, 8E)
        gates = jnp.concatenate([gin_f[t], gin_b[tb]], axis=1) + gh        # (B, 8E)

        # One sigmoid + one tanh over the full 8E gate vector.
        sig = jax.nn.sigmoid(gates)
        tnh = jnp.tanh(gates)

        # Forward direction, time t.
        cf_new = sig[:, E:2 * E] * cf + sig[:, 0:E] * tnh[:, 2 * E:3 * E]
        hf_new = sig[:, 3 * E:4 * E] * jnp.tanh(cf_new)
        valid_f = lens > t                                                 # (B, 1)
        hf = jnp.where(valid_f, hf_new, hf)
        cf = jnp.where(valid_f, cf_new, cf)
        mxf = jnp.where(valid_f, jnp.maximum(mxf, hf_new), mxf)

        # Backward direction, time tb = T-1-t (state stays 0 until tb = len-1).
        cb_new = sig[:, 5 * E:6 * E] * cb + sig[:, 4 * E:5 * E] * tnh[:, 6 * E:7 * E]
        hb_new = sig[:, 7 * E:8 * E] * jnp.tanh(cb_new)
        valid_b = lens > tb
        hb = jnp.where(valid_b, hb_new, hb)
        cb = jnp.where(valid_b, cb_new, cb)
        mxb = jnp.where(valid_b, jnp.maximum(mxb, hb_new), mxb)

    # pad_packed_sequence pads short sequences with zeros up to max(lengths);
    # those zero rows participate in torch.max(output, 1)[0].
    short = lens < maxlen
    mxf = jnp.where(short, jnp.maximum(mxf, 0.0), mxf)
    mxb = jnp.where(short, jnp.maximum(mxb, 0.0), mxb)

    # ---- fused MLP head: linear1 -> ReLU -> linear2 -> log_softmax(y / temp).
    doc = jnp.concatenate([mxf, mxb], axis=1)                              # (B, 2E)
    h1 = jnp.dot(doc.astype(jnp.bfloat16), w1_ref[...],
                 preferred_element_type=f32) + b1_ref[...]
    h1 = jnp.maximum(h1, 0.0)
    y = jnp.dot(h1, w2_ref[...], preferred_element_type=f32) + b2_ref[...]
    y = y * inv_temp
    m = jnp.max(y, axis=-1, keepdims=True)
    lse = jnp.log(jnp.sum(jnp.exp(y - m), axis=-1, keepdims=True)) + m
    out_ref[...] = y - lse


# ----------------------------------------------------------------------------
# Parameter init (deterministic, synthetic) -- weights stored in the fused
# layouts the kernel consumes (pre-transposed (in, out); bf16 matmul operands).
# ----------------------------------------------------------------------------
def init_params(key, vocab_size, embedding_dim, hidden_dim, label_size, pad_token=0):
    E = embedding_dim
    ks = jax.random.split(key, 12)

    def u(k, shape, scale):
        return jax.random.uniform(k, shape, jnp.float32, -scale, scale)

    emb = u(ks[0], (vocab_size, E), 0.1).at[pad_token].set(0.0)   # padding_idx row = 0

    s = 1.0 / float(E) ** 0.5
    wih_f = u(ks[1], (E, 4 * E), s); whh_f = u(ks[2], (E, 4 * E), s)
    b_f = u(ks[3], (1, 4 * E), s) + u(ks[4], (1, 4 * E), s)       # b_ih + b_hh
    wih_b = u(ks[5], (E, 4 * E), s); whh_b = u(ks[6], (E, 4 * E), s)
    b_b = u(ks[7], (1, 4 * E), s) + u(ks[8], (1, 4 * E), s)

    s1 = 1.0 / float(2 * E) ** 0.5
    s2 = 1.0 / float(hidden_dim) ** 0.5

    z = jnp.zeros((E, 4 * E), jnp.float32)
    whh_bd = jnp.concatenate(
        [jnp.concatenate([whh_f, z], axis=1),
         jnp.concatenate([z, whh_b], axis=1)], axis=0)            # blockdiag (2E, 8E)

    return dict(
        embedding=emb,
        wih_cat=jnp.concatenate([wih_f, wih_b], axis=1).astype(jnp.bfloat16),  # (E, 8E)
        bih_cat=jnp.concatenate([b_f, b_b], axis=1),                           # (1, 8E) f32
        whh_bd=whh_bd.astype(jnp.bfloat16),                                    # (2E, 8E)
        w1=u(ks[9], (2 * E, hidden_dim), s1).astype(jnp.bfloat16),
        b1=u(ks[10], (1, hidden_dim), s1),
        w2=u(ks[11], (hidden_dim, label_size), s2),
        b2=jnp.zeros((1, label_size), jnp.float32),
    )


def bilstm_mlp_forward(params, src, src_lengths, temperature=1.0):
    # TODO(synk): embedding gather stays in plain JAX (data-dependent row
    # gather); a DMA-gather Pallas kernel is not worthwhile at this size.
    emb = params["embedding"][src]                                # (B, T, E)
    B, T, E = emb.shape
    # Time-major flattening so the in-kernel input projection is one matmul:
    # row t*B + b  <->  token (b, t).
    x2d = jnp.transpose(emb, (1, 0, 2)).reshape(T * B, E).astype(jnp.bfloat16)
    lens = src_lengths.astype(jnp.int32).reshape(B, 1)
    maxlen = jnp.max(src_lengths).astype(jnp.int32).reshape(1)
    label_size = params["b2"].shape[1]

    vmem = pl.BlockSpec(memory_space=pltpu.MemorySpace.VMEM)
    smem = pl.BlockSpec(memory_space=pltpu.MemorySpace.SMEM)

    return pl.pallas_call(
        functools.partial(_bilstm_mlp_kernel, inv_temp=1.0 / float(temperature)),
        out_shape=jax.ShapeDtypeStruct((B, label_size), jnp.float32),
        in_specs=[smem, vmem, vmem, vmem, vmem, vmem, vmem, vmem, vmem, vmem],
        out_specs=vmem,
    )(maxlen, lens, x2d,
      params["wih_cat"], params["bih_cat"], params["whh_bd"],
      params["w1"], params["b1"], params["w2"], params["b2"])


if __name__ == "__main__":
    # Small shapes consistent with the module: B=2, T=8, E=32, hidden=64, labels=4.
    B, T = 2, 8
    vocab_size, embedding_dim, hidden_dim, label_size = 16, 32, 64, 4
    temperature = 1.0

    key = jax.random.PRNGKey(0)
    k_params, k_src = jax.random.split(key)
    params = init_params(k_params, vocab_size, embedding_dim, hidden_dim,
                         label_size, pad_token=0)

    # Sorted-descending lengths (pack_padded_sequence convention), pad token 0.
    src_lengths = jnp.array([8, 5], dtype=jnp.int32)
    src = jax.random.randint(k_src, (B, T), 1, vocab_size, dtype=jnp.int32)
    src = jnp.where(jnp.arange(T)[None, :] < src_lengths[:, None], src, 0)

    out = bilstm_mlp_forward(params, src, src_lengths, temperature)
    out = jax.block_until_ready(out)

    assert out.shape == (B, label_size)
    assert bool(jnp.all(jnp.isfinite(out)))
    # log_softmax rows must exponentiate-and-sum to ~1
    assert bool(jnp.all(jnp.abs(jnp.sum(jnp.exp(out), axis=-1) - 1.0) < 1e-3))
    print("KERNEL_OK")
</pallas_src>

<mosaic_0001>
module attributes {stable_mosaic.version = 11 : i64} {
  func.func @_bilstm_mlp_kernel(%arg0: memref<1xi32, #tpu.memory_space<smem>>, %arg1: memref<2x1xi32, #tpu.memory_space<vmem>>, %arg2: memref<16x32xbf16, #tpu.memory_space<vmem>>, %arg3: memref<32x256xbf16, #tpu.memory_space<vmem>>, %arg4: memref<1x256xf32, #tpu.memory_space<vmem>>, %arg5: memref<64x256xbf16, #tpu.memory_space<vmem>>, %arg6: memref<64x64xbf16, #tpu.memory_space<vmem>>, %arg7: memref<1x64xf32, #tpu.memory_space<vmem>>, %arg8: memref<64x4xf32, #tpu.memory_space<vmem>>, %arg9: memref<1x4xf32, #tpu.memory_space<vmem>>, %arg10: memref<2x4xf32, #tpu.memory_space<vmem>>) attributes {dimension_semantics = [], scalar_prefetch = 0 : i64, scratch_operands = 0 : i64, tpu.core_type = #tpu.core_type<tc>} {
    %c0 = arith.constant 0 : index
    %c0_0 = arith.constant 0 : index
    %0 = vector.load %arg1[%c0, %c0_0] : memref<2x1xi32, #tpu.memory_space<vmem>>, vector<2x1xi32>
    %c0_1 = arith.constant 0 : index
    %1 = memref.load %arg0[%c0_1] : memref<1xi32, #tpu.memory_space<smem>>
    %c0_2 = arith.constant 0 : index
    %c0_3 = arith.constant 0 : index
    %2 = vector.load %arg2[%c0_2, %c0_3] : memref<16x32xbf16, #tpu.memory_space<vmem>>, vector<16x32xbf16>
    %c0_4 = arith.constant 0 : index
    %c0_5 = arith.constant 0 : index
    %3 = vector.load %arg3[%c0_4, %c0_5] : memref<32x256xbf16, #tpu.memory_space<vmem>>, vector<32x256xbf16>
    %cst = arith.constant dense<0.000000e+00> : vector<16x256xf32>
    %4 = tpu.matmul %2, %3, %cst {dimension_numbers = #tpu.dot_dimension_numbers<[1], [0], [0], [1], [0, 0, 1, 1], [], []>} : vector<16x32xbf16>, vector<32x256xbf16>, vector<16x256xf32> -> vector<16x256xf32>
    %c0_6 = arith.constant 0 : index
    %c0_7 = arith.constant 0 : index
    %5 = vector.load %arg4[%c0_6, %c0_7] : memref<1x256xf32, #tpu.memory_space<vmem>>, vector<1x256xf32>
    %6 = vector.broadcast %5 : vector<1x256xf32> to vector<16x256xf32>
    %7 = arith.addf %4, %6 : vector<16x256xf32>
    %8 = vector.extract_strided_slice %7 {offsets = [0, 0], sizes = [2, 128], strides = [1, 1]} : vector<16x256xf32> to vector<2x128xf32>
    %9 = vector.extract_strided_slice %7 {offsets = [2, 0], sizes = [2, 128], strides = [1, 1]} : vector<16x256xf32> to vector<2x128xf32>
    %10 = vector.extract_strided_slice %7 {offsets = [4, 0], sizes = [2, 128], strides = [1, 1]} : vector<16x256xf32> to vector<2x128xf32>
    %11 = vector.extract_strided_slice %7 {offsets = [6, 0], sizes = [2, 128], strides = [1, 1]} : vector<16x256xf32> to vector<2x128xf32>
    %12 = vector.extract_strided_slice %7 {offsets = [8, 0], sizes = [2, 128], strides = [1, 1]} : vector<16x256xf32> to vector<2x128xf32>
    %13 = vector.extract_strided_slice %7 {offsets = [10, 0], sizes = [2, 128], strides = [1, 1]} : vector<16x256xf32> to vector<2x128xf32>
    %14 = vector.extract_strided_slice %7 {offsets = [12, 0], sizes = [2, 128], strides = [1, 1]} : vector<16x256xf32> to vector<2x128xf32>
    %15 = vector.extract_strided_slice %7 {offsets = [14, 0], sizes = [2, 128], strides = [1, 1]} : vector<16x256xf32> to vector<2x128xf32>
    %16 = vector.extract_strided_slice %7 {offsets = [0, 128], sizes = [2, 128], strides = [1, 1]} : vector<16x256xf32> to vector<2x128xf32>
    %17 = vector.extract_strided_slice %7 {offsets = [2, 128], sizes = [2, 128], strides = [1, 1]} : vector<16x256xf32> to vector<2x128xf32>
    %18 = vector.extract_strided_slice %7 {offsets = [4, 128], sizes = [2, 128], strides = [1, 1]} : vector<16x256xf32> to vector<2x128xf32>
    %19 = vector.extract_strided_slice %7 {offsets = [6, 128], sizes = [2, 128], strides = [1, 1]} : vector<16x256xf32> to vector<2x128xf32>
    %20 = vector.extract_strided_slice %7 {offsets = [8, 128], sizes = [2, 128], strides = [1, 1]} : vector<16x256xf32> to vector<2x128xf32>
    %21 = vector.extract_strided_slice %7 {offsets = [10, 128], sizes = [2, 128], strides = [1, 1]} : vector<16x256xf32> to vector<2x128xf32>
    %22 = vector.extract_strided_slice %7 {offsets = [12, 128], sizes = [2, 128], strides = [1, 1]} : vector<16x256xf32> to vector<2x128xf32>
    %23 = vector.extract_strided_slice %7 {offsets = [14, 128], sizes = [2, 128], strides = [1, 1]} : vector<16x256xf32> to vector<2x128xf32>
    %c0_8 = arith.constant 0 : index
    %c0_9 = arith.constant 0 : index
    %24 = vector.load %arg5[%c0_8, %c0_9] : memref<64x256xbf16, #tpu.memory_space<vmem>>, vector<64x256xbf16>
    %cst_10 = arith.constant 0.000000e+00 : f32
    %25 = vector.broadcast %cst_10 : f32 to vector<2x32xf32>
    %cst_11 = arith.constant 0xFF800000 : f32
    %26 = vector.broadcast %cst_11 : f32 to vector<2x32xf32>
    %27 = tpu.concatenate %25, %25 in 1 : vector<2x32xf32>, vector<2x32xf32> -> vector<2x64xf32>
    %28 = arith.truncf %27 : vector<2x64xf32> to vector<2x64xbf16>
    %cst_12 = arith.constant dense<0.000000e+00> : vector<2x256xf32>
    %29 = tpu.matmul %28, %24, %cst_12 {dimension_numbers = #tpu.dot_dimension_numbers<[1], [0], [0], [1], [0, 0, 1, 1], [], []>} : vector<2x64xbf16>, vector<64x256xbf16>, vector<2x256xf32> -> vector<2x256xf32>
    %30 = tpu.concatenate %8, %23 in 1 : vector<2x128xf32>, vector<2x128xf32> -> vector<2x256xf32>
    %31 = arith.addf %30, %29 : vector<2x256xf32>
    %32 = arith.negf %31 : vector<2x256xf32>
    %33 = math.exp %32 : vector<2x256xf32>
    %cst_13 = arith.constant 1.000000e+00 : f32
    %34 = vector.broadcast %cst_13 : f32 to vector<2x256xf32>
    %35 = arith.addf %34, %33 : vector<2x256xf32>
    %36 = arith.divf %34, %35 : vector<2x256xf32>
    %37 = math.tanh %31 : vector<2x256xf32>
    %38 = vector.extract_strided_slice %36 {offsets = [0, 32], sizes = [2, 32], strides = [1, 1]} : vector<2x256xf32> to vector<2x32xf32>
    %39 = arith.mulf %38, %25 : vector<2x32xf32>
    %40 = vector.extract_strided_slice %36 {offsets = [0, 0], sizes = [2, 32], strides = [1, 1]} : vector<2x256xf32> to vector<2x32xf32>
    %41 = vector.extract_strided_slice %37 {offsets = [0, 64], sizes = [2, 32], strides = [1, 1]} : vector<2x256xf32> to vector<2x32xf32>
    %42 = arith.mulf %40, %41 : vector<2x32xf32>
    %43 = arith.addf %39, %42 : vector<2x32xf32>
    %44 = vector.extract_strided_slice %36 {offsets = [0, 96], sizes = [2, 32], strides = [1, 1]} : vector<2x256xf32> to vector<2x32xf32>
    %45 = math.tanh %43 : vector<2x32xf32>
    %46 = arith.mulf %44, %45 : vector<2x32xf32>
    %c0_i32 = arith.constant 0 : i32
    %47 = vector.broadcast %c0_i32 : i32 to vector<2x1xi32>
    %48 = arith.cmpi sgt, %0, %47 : vector<2x1xi32>
    %49 = vector.shape_cast %48 : vector<2x1xi1> to vector<2x1xi1>
    %50 = vector.broadcast %49 : vector<2x1xi1> to vector<2x32xi1>
    %51 = arith.select %50, %46, %25 : vector<2x32xi1>, vector<2x32xf32>
    %52 = vector.shape_cast %48 : vector<2x1xi1> to vector<2x1xi1>
    %53 = vector.broadcast %52 : vector<2x1xi1> to vector<2x32xi1>
    %54 = arith.select %53, %43, %25 : vector<2x32xi1>, vector<2x32xf32>
    %55 = arith.maximumf %26, %46 : vector<2x32xf32>
    %56 = vector.shape_cast %48 : vector<2x1xi1> to vector<2x1xi1>
    %57 = vector.broadcast %56 : vector<2x1xi1> to vector<2x32xi1>
    %58 = arith.select %57, %55, %26 : vector<2x32xi1>, vector<2x32xf32>
    %59 = vector.extract_strided_slice %36 {offsets = [0, 160], sizes = [2, 32], strides = [1, 1]} : vector<2x256xf32> to vector<2x32xf32>
    %60 = arith.mulf %59, %25 : vector<2x32xf32>
    %61 = vector.extract_strided_slice %36 {offsets = [0, 128], sizes = [2, 32], strides = [1, 1]} : vector<2x256xf32> to vector<2x32xf32>
    %62 = vector.extract_strided_slice %37 {offsets = [0, 192], sizes = [2, 32], strides = [1, 1]} : vector<2x256xf32> to vector<2x32xf32>
    %63 = arith.mulf %61, %62 : vector<2x32xf32>
    %64 = arith.addf %60, %63 : vector<2x32xf32>
    %65 = vector.extract_strided_slice %36 {offsets = [0, 224], sizes = [2, 32], strides = [1, 1]} : vector<2x256xf32> to vector<2x32xf32>
    %66 = math.tanh %64 : vector<2x32xf32>
    %67 = arith.mulf %65, %66 : vector<2x32xf32>
    %c7_i32 = arith.constant 7 : i32
    %68 = vector.broadcast %c7_i32 : i32 to vector<2x1xi32>
    %69 = arith.cmpi sgt, %0, %68 : vector<2x1xi32>
    %70 = vector.shape_cast %69 : vector<2x1xi1> to vector<2x1xi1>
    %71 = vector.broadcast %70 : vector<2x1xi1> to vector<2x32xi1>
    %72 = arith.select %71, %67, %25 : vector<2x32xi1>, vector<2x32xf32>
    %73 = vector.shape_cast %69 : vector<2x1xi1> to vector<2x1xi1>
    %74 = vector.broadcast %73 : vector<2x1xi1> to vector<2x32xi1>
    %75 = arith.select %74, %64, %25 : vector<2x32xi1>, vector<2x32xf32>
    %76 = arith.maximumf %26, %67 : vector<2x32xf32>
    %77 = vector.shape_cast %69 : vector<2x1xi1> to vector<2x1xi1>
    %78 = vector.broadcast %77 : vector<2x1xi1> to vector<2x32xi1>
    %79 = arith.select %78, %76, %26 : vector<2x32xi1>, vector<2x32xf32>
    %80 = tpu.concatenate %51, %72 in 1 : vector<2x32xf32>, vector<2x32xf32> -> vector<2x64xf32>
    %81 = arith.truncf %80 : vector<2x64xf32> to vector<2x64xbf16>
    %cst_14 = arith.constant dense<0.000000e+00> : vector<2x256xf32>
    %82 = tpu.matmul %81, %24, %cst_14 {dimension_numbers = #tpu.dot_dimension_numbers<[1], [0], [0], [1], [0, 0, 1, 1], [], []>} : vector<2x64xbf16>, vector<64x256xbf16>, vector<2x256xf32> -> vector<2x256xf32>
    %83 = tpu.concatenate %9, %22 in 1 : vector<2x128xf32>, vector<2x128xf32> -> vector<2x256xf32>
    %84 = arith.addf %83, %82 : vector<2x256xf32>
    %85 = arith.negf %84 : vector<2x256xf32>
    %86 = math.exp %85 : vector<2x256xf32>
    %cst_15 = arith.constant 1.000000e+00 : f32
    %87 = vector.broadcast %cst_15 : f32 to vector<2x256xf32>
    %88 = arith.addf %87, %86 : vector<2x256xf32>
    %89 = arith.divf %87, %88 : vector<2x256xf32>
    %90 = math.tanh %84 : vector<2x256xf32>
    %91 = vector.extract_strided_slice %89 {offsets = [0, 32], sizes = [2, 32], strides = [1, 1]} : vector<2x256xf32> to vector<2x32xf32>
    %92 = arith.mulf %91, %54 : vector<2x32xf32>
    %93 = vector.extract_strided_slice %89 {offsets = [0, 0], sizes = [2, 32], strides = [1, 1]} : vector<2x256xf32> to vector<2x32xf32>
    %94 = vector.extract_strided_slice %90 {offsets = [0, 64], sizes = [2, 32], strides = [1, 1]} : vector<2x256xf32> to vector<2x32xf32>
    %95 = arith.mulf %93, %94 : vector<2x32xf32>
    %96 = arith.addf %92, %95 : vector<2x32xf32>
    %97 = vector.extract_strided_slice %89 {offsets = [0, 96], sizes = [2, 32], strides = [1, 1]} : vector<2x256xf32> to vector<2x32xf32>
    %98 = math.tanh %96 : vector<2x32xf32>
    %99 = arith.mulf %97, %98 : vector<2x32xf32>
    %c1_i32 = arith.constant 1 : i32
    %100 = vector.broadcast %c1_i32 : i32 to vector<2x1xi32>
    %101 = arith.cmpi sgt, %0, %100 : vector<2x1xi32>
    %102 = vector.shape_cast %101 : vector<2x1xi1> to vector<2x1xi1>
    %103 = vector.broadcast %102 : vector<2x1xi1> to vector<2x32xi1>
    %104 = arith.select %103, %99, %51 : vector<2x32xi1>, vector<2x32xf32>
    %105 = vector.shape_cast %101 : vector<2x1xi1> to vector<2x1xi1>
    %106 = vector.broadcast %105 : vector<2x1xi1> to vector<2x32xi1>
    %107 = arith.select %106, %96, %54 : vector<2x32xi1>, vector<2x32xf32>
    %108 = arith.maximumf %58, %99 : vector<2x32xf32>
    %109 = vector.shape_cast %101 : vector<2x1xi1> to vector<2x1xi1>
    %110 = vector.broadcast %109 : vector<2x1xi1> to vector<2x32xi1>
    %111 = arith.select %110, %108, %58 : vector<2x32xi1>, vector<2x32xf32>
    %112 = vector.extract_strided_slice %89 {offsets = [0, 160], sizes = [2, 32], strides = [1, 1]} : vector<2x256xf32> to vector<2x32xf32>
    %113 = arith.mulf %112, %75 : vector<2x32xf32>
    %114 = vector.extract_strided_slice %89 {offsets = [0, 128], sizes = [2, 32], strides = [1, 1]} : vector<2x256xf32> to vector<2x32xf32>
    %115 = vector.extract_strided_slice %90 {offsets = [0, 192], sizes = [2, 32], strides = [1, 1]} : vector<2x256xf32> to vector<2x32xf32>
    %116 = arith.mulf %114, %115 : vector<2x32xf32>
    %117 = arith.addf %113, %116 : vector<2x32xf32>
    %118 = vector.extract_strided_slice %89 {offsets = [0, 224], sizes = [2, 32], strides = [1, 1]} : vector<2x256xf32> to vector<2x32xf32>
    %119 = math.tanh %117 : vector<2x32xf32>
    %120 = arith.mulf %118, %119 : vector<2x32xf32>
    %c6_i32 = arith.constant 6 : i32
    %121 = vector.broadcast %c6_i32 : i32 to vector<2x1xi32>
    %122 = arith.cmpi sgt, %0, %121 : vector<2x1xi32>
    %123 = vector.shape_cast %122 : vector<2x1xi1> to vector<2x1xi1>
    %124 = vector.broadcast %123 : vector<2x1xi1> to vector<2x32xi1>
    %125 = arith.select %124, %120, %72 : vector<2x32xi1>, vector<2x32xf32>
    %126 = vector.shape_cast %122 : vector<2x1xi1> to vector<2x1xi1>
    %127 = vector.broadcast %126 : vector<2x1xi1> to vector<2x32xi1>
    %128 = arith.select %127, %117, %75 : vector<2x32xi1>, vector<2x32xf32>
    %129 = arith.maximumf %79, %120 : vector<2x32xf32>
    %130 = vector.shape_cast %122 : vector<2x1xi1> to vector<2x1xi1>
    %131 = vector.broadcast %130 : vector<2x1xi1> to vector<2x32xi1>
    %132 = arith.select %131, %129, %79 : vector<2x32xi1>, vector<2x32xf32>
    %133 = tpu.concatenate %104, %125 in 1 : vector<2x32xf32>, vector<2x32xf32> -> vector<2x64xf32>
    %134 = arith.truncf %133 : vector<2x64xf32> to vector<2x64xbf16>
    %cst_16 = arith.constant dense<0.000000e+00> : vector<2x256xf32>
    %135 = tpu.matmul %134, %24, %cst_16 {dimension_numbers = #tpu.dot_dimension_numbers<[1], [0], [0], [1], [0, 0, 1, 1], [], []>} : vector<2x64xbf16>, vector<64x256xbf16>, vector<2x256xf32> -> vector<2x256xf32>
    %136 = tpu.concatenate %10, %21 in 1 : vector<2x128xf32>, vector<2x128xf32> -> vector<2x256xf32>
    %137 = arith.addf %136, %135 : vector<2x256xf32>
    %138 = arith.negf %137 : vector<2x256xf32>
    %139 = math.exp %138 : vector<2x256xf32>
    %cst_17 = arith.constant 1.000000e+00 : f32
    %140 = vector.broadcast %cst_17 : f32 to vector<2x256xf32>
    %141 = arith.addf %140, %139 : vector<2x256xf32>
    %142 = arith.divf %140, %141 : vector<2x256xf32>
    %143 = math.tanh %137 : vector<2x256xf32>
    %144 = vector.extract_strided_slice %142 {offsets = [0, 32], sizes = [2, 32], strides = [1, 1]} : vector<2x256xf32> to vector<2x32xf32>
    %145 = arith.mulf %144, %107 : vector<2x32xf32>
    %146 = vector.extract_strided_slice %142 {offsets = [0, 0], sizes = [2, 32], strides = [1, 1]} : vector<2x256xf32> to vector<2x32xf32>
    %147 = vector.extract_strided_slice %143 {offsets = [0, 64], sizes = [2, 32], strides = [1, 1]} : vector<2x256xf32> to vector<2x32xf32>
    %148 = arith.mulf %146, %147 : vector<2x32xf32>
    %149 = arith.addf %145, %148 : vector<2x32xf32>
    %150 = vector.extract_strided_slice %142 {offsets = [0, 96], sizes = [2, 32], strides = [1, 1]} : vector<2x256xf32> to vector<2x32xf32>
    %151 = math.tanh %149 : vector<2x32xf32>
    %152 = arith.mulf %150, %151 : vector<2x32xf32>
    %c2_i32 = arith.constant 2 : i32
    %153 = vector.broadcast %c2_i32 : i32 to vector<2x1xi32>
    %154 = arith.cmpi sgt, %0, %153 : vector<2x1xi32>
    %155 = vector.shape_cast %154 : vector<2x1xi1> to vector<2x1xi1>
    %156 = vector.broadcast %155 : vector<2x1xi1> to vector<2x32xi1>
    %157 = arith.select %156, %152, %104 : vector<2x32xi1>, vector<2x32xf32>
    %158 = vector.shape_cast %154 : vector<2x1xi1> to vector<2x1xi1>
    %159 = vector.broadcast %158 : vector<2x1xi1> to vector<2x32xi1>
    %160 = arith.select %159, %149, %107 : vector<2x32xi1>, vector<2x32xf32>
    %161 = arith.maximumf %111, %152 : vector<2x32xf32>
    %162 = vector.shape_cast %154 : vector<2x1xi1> to vector<2x1xi1>
    %163 = vector.broadcast %162 : vector<2x1xi1> to vector<2x32xi1>
    %164 = arith.select %163, %161, %111 : vector<2x32xi1>, vector<2x32xf32>
    %165 = vector.extract_strided_slice %142 {offsets = [0, 160], sizes = [2, 32], strides = [1, 1]} : vector<2x256xf32> to vector<2x32xf32>
    %166 = arith.mulf %165, %128 : vector<2x32xf32>
    %167 = vector.extract_strided_slice %142 {offsets = [0, 128], sizes = [2, 32], strides = [1, 1]} : vector<2x256xf32> to vector<2x32xf32>
    %168 = vector.extract_strided_slice %143 {offsets = [0, 192], sizes = [2, 32], strides = [1, 1]} : vector<2x256xf32> to vector<2x32xf32>
    %169 = arith.mulf %167, %168 : vector<2x32xf32>
    %170 = arith.addf %166, %169 : vector<2x32xf32>
    %171 = vector.extract_strided_slice %142 {offsets = [0, 224], sizes = [2, 32], strides = [1, 1]} : vector<2x256xf32> to vector<2x32xf32>
    %172 = math.tanh %170 : vector<2x32xf32>
    %173 = arith.mulf %171, %172 : vector<2x32xf32>
    %c5_i32 = arith.constant 5 : i32
    %174 = vector.broadcast %c5_i32 : i32 to vector<2x1xi32>
    %175 = arith.cmpi sgt, %0, %174 : vector<2x1xi32>
    %176 = vector.shape_cast %175 : vector<2x1xi1> to vector<2x1xi1>
    %177 = vector.broadcast %176 : vector<2x1xi1> to vector<2x32xi1>
    %178 = arith.select %177, %173, %125 : vector<2x32xi1>, vector<2x32xf32>
    %179 = vector.shape_cast %175 : vector<2x1xi1> to vector<2x1xi1>
    %180 = vector.broadcast %179 : vector<2x1xi1> to vector<2x32xi1>
    %181 = arith.select %180, %170, %128 : vector<2x32xi1>, vector<2x32xf32>
    %182 = arith.maximumf %132, %173 : vector<2x32xf32>
    %183 = vector.shape_cast %175 : vector<2x1xi1> to vector<2x1xi1>
    %184 = vector.broadcast %183 : vector<2x1xi1> to vector<2x32xi1>
    %185 = arith.select %184, %182, %132 : vector<2x32xi1>, vector<2x32xf32>
    %186 = tpu.concatenate %157, %178 in 1 : vector<2x32xf32>, vector<2x32xf32> -> vector<2x64xf32>
    %187 = arith.truncf %186 : vector<2x64xf32> to vector<2x64xbf16>
    %cst_18 = arith.constant dense<0.000000e+00> : vector<2x256xf32>
    %188 = tpu.matmul %187, %24, %cst_18 {dimension_numbers = #tpu.dot_dimension_numbers<[1], [0], [0], [1], [0, 0, 1, 1], [], []>} : vector<2x64xbf16>, vector<64x256xbf16>, vector<2x256xf32> -> vector<2x256xf32>
    %189 = tpu.concatenate %11, %20 in 1 : vector<2x128xf32>, vector<2x128xf32> -> vector<2x256xf32>
    %190 = arith.addf %189, %188 : vector<2x256xf32>
    %191 = arith.negf %190 : vector<2x256xf32>
    %192 = math.exp %191 : vector<2x256xf32>
    %cst_19 = arith.constant 1.000000e+00 : f32
    %193 = vector.broadcast %cst_19 : f32 to vector<2x256xf32>
    %194 = arith.addf %193, %192 : vector<2x256xf32>
    %195 = arith.divf %193, %194 : vector<2x256xf32>
    %196 = math.tanh %190 : vector<2x256xf32>
    %197 = vector.extract_strided_slice %195 {offsets = [0, 32], sizes = [2, 32], strides = [1, 1]} : vector<2x256xf32> to vector<2x32xf32>
    %198 = arith.mulf %197, %160 : vector<2x32xf32>
    %199 = vector.extract_strided_slice %195 {offsets = [0, 0], sizes = [2, 32], strides = [1, 1]} : vector<2x256xf32> to vector<2x32xf32>
    %200 = vector.extract_strided_slice %196 {offsets = [0, 64], sizes = [2, 32], strides = [1, 1]} : vector<2x256xf32> to vector<2x32xf32>
    %201 = arith.mulf %199, %200 : vector<2x32xf32>
    %202 = arith.addf %198, %201 : vector<2x32xf32>
    %203 = vector.extract_strided_slice %195 {offsets = [0, 96], sizes = [2, 32], strides = [1, 1]} : vector<2x256xf32> to vector<2x32xf32>
    %204 = math.tanh %202 : vector<2x32xf32>
    %205 = arith.mulf %203, %204 : vector<2x32xf32>
    %c3_i32 = arith.constant 3 : i32
    %206 = vector.broadcast %c3_i32 : i32 to vector<2x1xi32>
    %207 = arith.cmpi sgt, %0, %206 : vector<2x1xi32>
    %208 = vector.shape_cast %207 : vector<2x1xi1> to vector<2x1xi1>
    %209 = vector.broadcast %208 : vector<2x1xi1> to vector<2x32xi1>
    %210 = arith.select %209, %205, %157 : vector<2x32xi1>, vector<2x32xf32>
    %211 = vector.shape_cast %207 : vector<2x1xi1> to vector<2x1xi1>
    %212 = vector.broadcast %211 : vector<2x1xi1> to vector<2x32xi1>
    %213 = arith.select %212, %202, %160 : vector<2x32xi1>, vector<2x32xf32>
    %214 = arith.maximumf %164, %205 : vector<2x32xf32>
    %215 = vector.shape_cast %207 : vector<2x1xi1> to vector<2x1xi1>
    %216 = vector.broadcast %215 : vector<2x1xi1> to vector<2x32xi1>
    %217 = arith.select %216, %214, %164 : vector<2x32xi1>, vector<2x32xf32>
    %218 = vector.extract_strided_slice %195 {offsets = [0, 160], sizes = [2, 32], strides = [1, 1]} : vector<2x256xf32> to vector<2x32xf32>
    %219 = arith.mulf %218, %181 : vector<2x32xf32>
    %220 = vector.extract_strided_slice %195 {offsets = [0, 128], sizes = [2, 32], strides = [1, 1]} : vector<2x256xf32> to vector<2x32xf32>
    %221 = vector.extract_strided_slice %196 {offsets = [0, 192], sizes = [2, 32], strides = [1, 1]} : vector<2x256xf32> to vector<2x32xf32>
    %222 = arith.mulf %220, %221 : vector<2x32xf32>
    %223 = arith.addf %219, %222 : vector<2x32xf32>
    %224 = vector.extract_strided_slice %195 {offsets = [0, 224], sizes = [2, 32], strides = [1, 1]} : vector<2x256xf32> to vector<2x32xf32>
    %225 = math.tanh %223 : vector<2x32xf32>
    %226 = arith.mulf %224, %225 : vector<2x32xf32>
    %c4_i32 = arith.constant 4 : i32
    %227 = vector.broadcast %c4_i32 : i32 to vector<2x1xi32>
    %228 = arith.cmpi sgt, %0, %227 : vector<2x1xi32>
    %229 = vector.shape_cast %228 : vector<2x1xi1> to vector<2x1xi1>
    %230 = vector.broadcast %229 : vector<2x1xi1> to vector<2x32xi1>
    %231 = arith.select %230, %226, %178 : vector<2x32xi1>, vector<2x32xf32>
    %232 = vector.shape_cast %228 : vector<2x1xi1> to vector<2x1xi1>
    %233 = vector.broadcast %232 : vector<2x1xi1> to vector<2x32xi1>
    %234 = arith.select %233, %223, %181 : vector<2x32xi1>, vector<2x32xf32>
    %235 = arith.maximumf %185, %226 : vector<2x32xf32>
    %236 = vector.shape_cast %228 : vector<2x1xi1> to vector<2x1xi1>
    %237 = vector.broadcast %236 : vector<2x1xi1> to vector<2x32xi1>
    %238 = arith.select %237, %235, %185 : vector<2x32xi1>, vector<2x32xf32>
    %239 = tpu.concatenate %210, %231 in 1 : vector<2x32xf32>, vector<2x32xf32> -> vector<2x64xf32>
    %240 = arith.truncf %239 : vector<2x64xf32> to vector<2x64xbf16>
    %cst_20 = arith.constant dense<0.000000e+00> : vector<2x256xf32>
    %241 = tpu.matmul %240, %24, %cst_20 {dimension_numbers = #tpu.dot_dimension_numbers<[1], [0], [0], [1], [0, 0, 1, 1], [], []>} : vector<2x64xbf16>, vector<64x256xbf16>, vector<2x256xf32> -> vector<2x256xf32>
    %242 = tpu.concatenate %12, %19 in 1 : vector<2x128xf32>, vector<2x128xf32> -> vector<2x256xf32>
    %243 = arith.addf %242, %241 : vector<2x256xf32>
    %244 = arith.negf %243 : vector<2x256xf32>
    %245 = math.exp %244 : vector<2x256xf32>
    %cst_21 = arith.constant 1.000000e+00 : f32
    %246 = vector.broadcast %cst_21 : f32 to vector<2x256xf32>
    %247 = arith.addf %246, %245 : vector<2x256xf32>
    %248 = arith.divf %246, %247 : vector<2x256xf32>
    %249 = math.tanh %243 : vector<2x256xf32>
    %250 = vector.extract_strided_slice %248 {offsets = [0, 32], sizes = [2, 32], strides = [1, 1]} : vector<2x256xf32> to vector<2x32xf32>
    %251 = arith.mulf %250, %213 : vector<2x32xf32>
    %252 = vector.extract_strided_slice %248 {offsets = [0, 0], sizes = [2, 32], strides = [1, 1]} : vector<2x256xf32> to vector<2x32xf32>
    %253 = vector.extract_strided_slice %249 {offsets = [0, 64], sizes = [2, 32], strides = [1, 1]} : vector<2x256xf32> to vector<2x32xf32>
    %254 = arith.mulf %252, %253 : vector<2x32xf32>
    %255 = arith.addf %251, %254 : vector<2x32xf32>
    %256 = vector.extract_strided_slice %248 {offsets = [0, 96], sizes = [2, 32], strides = [1, 1]} : vector<2x256xf32> to vector<2x32xf32>
    %257 = math.tanh %255 : vector<2x32xf32>
    %258 = arith.mulf %256, %257 : vector<2x32xf32>
    %c4_i32_22 = arith.constant 4 : i32
    %259 = vector.broadcast %c4_i32_22 : i32 to vector<2x1xi32>
    %260 = arith.cmpi sgt, %0, %259 : vector<2x1xi32>
    %261 = vector.shape_cast %260 : vector<2x1xi1> to vector<2x1xi1>
    %262 = vector.broadcast %261 : vector<2x1xi1> to vector<2x32xi1>
    %263 = arith.select %262, %258, %210 : vector<2x32xi1>, vector<2x32xf32>
    %264 = vector.shape_cast %260 : vector<2x1xi1> to vector<2x1xi1>
    %265 = vector.broadcast %264 : vector<2x1xi1> to vector<2x32xi1>
    %266 = arith.select %265, %255, %213 : vector<2x32xi1>, vector<2x32xf32>
    %267 = arith.maximumf %217, %258 : vector<2x32xf32>
    %268 = vector.shape_cast %260 : vector<2x1xi1> to vector<2x1xi1>
    %269 = vector.broadcast %268 : vector<2x1xi1> to vector<2x32xi1>
    %270 = arith.select %269, %267, %217 : vector<2x32xi1>, vector<2x32xf32>
    %271 = vector.extract_strided_slice %248 {offsets = [0, 160], sizes = [2, 32], strides = [1, 1]} : vector<2x256xf32> to vector<2x32xf32>
    %272 = arith.mulf %271, %234 : vector<2x32xf32>
    %273 = vector.extract_strided_slice %248 {offsets = [0, 128], sizes = [2, 32], strides = [1, 1]} : vector<2x256xf32> to vector<2x32xf32>
    %274 = vector.extract_strided_slice %249 {offsets = [0, 192], sizes = [2, 32], strides = [1, 1]} : vector<2x256xf32> to vector<2x32xf32>
    %275 = arith.mulf %273, %274 : vector<2x32xf32>
    %276 = arith.addf %272, %275 : vector<2x32xf32>
    %277 = vector.extract_strided_slice %248 {offsets = [0, 224], sizes = [2, 32], strides = [1, 1]} : vector<2x256xf32> to vector<2x32xf32>
    %278 = math.tanh %276 : vector<2x32xf32>
    %279 = arith.mulf %277, %278 : vector<2x32xf32>
    %c3_i32_23 = arith.constant 3 : i32
    %280 = vector.broadcast %c3_i32_23 : i32 to vector<2x1xi32>
    %281 = arith.cmpi sgt, %0, %280 : vector<2x1xi32>
    %282 = vector.shape_cast %281 : vector<2x1xi1> to vector<2x1xi1>
    %283 = vector.broadcast %282 : vector<2x1xi1> to vector<2x32xi1>
    %284 = arith.select %283, %279, %231 : vector<2x32xi1>, vector<2x32xf32>
    %285 = vector.shape_cast %281 : vector<2x1xi1> to vector<2x1xi1>
    %286 = vector.broadcast %285 : vector<2x1xi1> to vector<2x32xi1>
    %287 = arith.select %286, %276, %234 : vector<2x32xi1>, vector<2x32xf32>
    %288 = arith.maximumf %238, %279 : vector<2x32xf32>
    %289 = vector.shape_cast %281 : vector<2x1xi1> to vector<2x1xi1>
    %290 = vector.broadcast %289 : vector<2x1xi1> to vector<2x32xi1>
    %291 = arith.select %290, %288, %238 : vector<2x32xi1>, vector<2x32xf32>
    %292 = tpu.concatenate %263, %284 in 1 : vector<2x32xf32>, vector<2x32xf32> -> vector<2x64xf32>
    %293 = arith.truncf %292 : vector<2x64xf32> to vector<2x64xbf16>
    %cst_24 = arith.constant dense<0.000000e+00> : vector<2x256xf32>
    %294 = tpu.matmul %293, %24, %cst_24 {dimension_numbers = #tpu.dot_dimension_numbers<[1], [0], [0], [1], [0, 0, 1, 1], [], []>} : vector<2x64xbf16>, vector<64x256xbf16>, vector<2x256xf32> -> vector<2x256xf32>
    %295 = tpu.concatenate %13, %18 in 1 : vector<2x128xf32>, vector<2x128xf32> -> vector<2x256xf32>
    %296 = arith.addf %295, %294 : vector<2x256xf32>
    %297 = arith.negf %296 : vector<2x256xf32>
    %298 = math.exp %297 : vector<2x256xf32>
    %cst_25 = arith.constant 1.000000e+00 : f32
    %299 = vector.broadcast %cst_25 : f32 to vector<2x256xf32>
    %300 = arith.addf %299, %298 : vector<2x256xf32>
    %301 = arith.divf %299, %300 : vector<2x256xf32>
    %302 = math.tanh %296 : vector<2x256xf32>
    %303 = vector.extract_strided_slice %301 {offsets = [0, 32], sizes = [2, 32], strides = [1, 1]} : vector<2x256xf32> to vector<2x32xf32>
    %304 = arith.mulf %303, %266 : vector<2x32xf32>
    %305 = vector.extract_strided_slice %301 {offsets = [0, 0], sizes = [2, 32], strides = [1, 1]} : vector<2x256xf32> to vector<2x32xf32>
    %306 = vector.extract_strided_slice %302 {offsets = [0, 64], sizes = [2, 32], strides = [1, 1]} : vector<2x256xf32> to vector<2x32xf32>
    %307 = arith.mulf %305, %306 : vector<2x32xf32>
    %308 = arith.addf %304, %307 : vector<2x32xf32>
    %309 = vector.extract_strided_slice %301 {offsets = [0, 96], sizes = [2, 32], strides = [1, 1]} : vector<2x256xf32> to vector<2x32xf32>
    %310 = math.tanh %308 : vector<2x32xf32>
    %311 = arith.mulf %309, %310 : vector<2x32xf32>
    %c5_i32_26 = arith.constant 5 : i32
    %312 = vector.broadcast %c5_i32_26 : i32 to vector<2x1xi32>
    %313 = arith.cmpi sgt, %0, %312 : vector<2x1xi32>
    %314 = vector.shape_cast %313 : vector<2x1xi1> to vector<2x1xi1>
    %315 = vector.broadcast %314 : vector<2x1xi1> to vector<2x32xi1>
    %316 = arith.select %315, %311, %263 : vector<2x32xi1>, vector<2x32xf32>
    %317 = vector.shape_cast %313 : vector<2x1xi1> to vector<2x1xi1>
    %318 = vector.broadcast %317 : vector<2x1xi1> to vector<2x32xi1>
    %319 = arith.select %318, %308, %266 : vector<2x32xi1>, vector<2x32xf32>
    %320 = arith.maximumf %270, %311 : vector<2x32xf32>
    %321 = vector.shape_cast %313 : vector<2x1xi1> to vector<2x1xi1>
    %322 = vector.broadcast %321 : vector<2x1xi1> to vector<2x32xi1>
    %323 = arith.select %322, %320, %270 : vector<2x32xi1>, vector<2x32xf32>
    %324 = vector.extract_strided_slice %301 {offsets = [0, 160], sizes = [2, 32], strides = [1, 1]} : vector<2x256xf32> to vector<2x32xf32>
    %325 = arith.mulf %324, %287 : vector<2x32xf32>
    %326 = vector.extract_strided_slice %301 {offsets = [0, 128], sizes = [2, 32], strides = [1, 1]} : vector<2x256xf32> to vector<2x32xf32>
    %327 = vector.extract_strided_slice %302 {offsets = [0, 192], sizes = [2, 32], strides = [1, 1]} : vector<2x256xf32> to vector<2x32xf32>
    %328 = arith.mulf %326, %327 : vector<2x32xf32>
    %329 = arith.addf %325, %328 : vector<2x32xf32>
    %330 = vector.extract_strided_slice %301 {offsets = [0, 224], sizes = [2, 32], strides = [1, 1]} : vector<2x256xf32> to vector<2x32xf32>
    %331 = math.tanh %329 : vector<2x32xf32>
    %332 = arith.mulf %330, %331 : vector<2x32xf32>
    %c2_i32_27 = arith.constant 2 : i32
    %333 = vector.broadcast %c2_i32_27 : i32 to vector<2x1xi32>
    %334 = arith.cmpi sgt, %0, %333 : vector<2x1xi32>
    %335 = vector.shape_cast %334 : vector<2x1xi1> to vector<2x1xi1>
    %336 = vector.broadcast %335 : vector<2x1xi1> to vector<2x32xi1>
    %337 = arith.select %336, %332, %284 : vector<2x32xi1>, vector<2x32xf32>
    %338 = vector.shape_cast %334 : vector<2x1xi1> to vector<2x1xi1>
    %339 = vector.broadcast %338 : vector<2x1xi1> to vector<2x32xi1>
    %340 = arith.select %339, %329, %287 : vector<2x32xi1>, vector<2x32xf32>
    %341 = arith.maximumf %291, %332 : vector<2x32xf32>
    %342 = vector.shape_cast %334 : vector<2x1xi1> to vector<2x1xi1>
    %343 = vector.broadcast %342 : vector<2x1xi1> to vector<2x32xi1>
    %344 = arith.select %343, %341, %291 : vector<2x32xi1>, vector<2x32xf32>
    %345 = tpu.concatenate %316, %337 in 1 : vector<2x32xf32>, vector<2x32xf32> -> vector<2x64xf32>
    %346 = arith.truncf %345 : vector<2x64xf32> to vector<2x64xbf16>
    %cst_28 = arith.constant dense<0.000000e+00> : vector<2x256xf32>
    %347 = tpu.matmul %346, %24, %cst_28 {dimension_numbers = #tpu.dot_dimension_numbers<[1], [0], [0], [1], [0, 0, 1, 1], [], []>} : vector<2x64xbf16>, vector<64x256xbf16>, vector<2x256xf32> -> vector<2x256xf32>
    %348 = tpu.concatenate %14, %17 in 1 : vector<2x128xf32>, vector<2x128xf32> -> vector<2x256xf32>
    %349 = arith.addf %348, %347 : vector<2x256xf32>
    %350 = arith.negf %349 : vector<2x256xf32>
    %351 = math.exp %350 : vector<2x256xf32>
    %cst_29 = arith.constant 1.000000e+00 : f32
    %352 = vector.broadcast %cst_29 : f32 to vector<2x256xf32>
    %353 = arith.addf %352, %351 : vector<2x256xf32>
    %354 = arith.divf %352, %353 : vector<2x256xf32>
    %355 = math.tanh %349 : vector<2x256xf32>
    %356 = vector.extract_strided_slice %354 {offsets = [0, 32], sizes = [2, 32], strides = [1, 1]} : vector<2x256xf32> to vector<2x32xf32>
    %357 = arith.mulf %356, %319 : vector<2x32xf32>
    %358 = vector.extract_strided_slice %354 {offsets = [0, 0], sizes = [2, 32], strides = [1, 1]} : vector<2x256xf32> to vector<2x32xf32>
    %359 = vector.extract_strided_slice %355 {offsets = [0, 64], sizes = [2, 32], strides = [1, 1]} : vector<2x256xf32> to vector<2x32xf32>
    %360 = arith.mulf %358, %359 : vector<2x32xf32>
    %361 = arith.addf %357, %360 : vector<2x32xf32>
    %362 = vector.extract_strided_slice %354 {offsets = [0, 96], sizes = [2, 32], strides = [1, 1]} : vector<2x256xf32> to vector<2x32xf32>
    %363 = math.tanh %361 : vector<2x32xf32>
    %364 = arith.mulf %362, %363 : vector<2x32xf32>
    %c6_i32_30 = arith.constant 6 : i32
    %365 = vector.broadcast %c6_i32_30 : i32 to vector<2x1xi32>
    %366 = arith.cmpi sgt, %0, %365 : vector<2x1xi32>
    %367 = vector.shape_cast %366 : vector<2x1xi1> to vector<2x1xi1>
    %368 = vector.broadcast %367 : vector<2x1xi1> to vector<2x32xi1>
    %369 = arith.select %368, %364, %316 : vector<2x32xi1>, vector<2x32xf32>
    %370 = vector.shape_cast %366 : vector<2x1xi1> to vector<2x1xi1>
    %371 = vector.broadcast %370 : vector<2x1xi1> to vector<2x32xi1>
    %372 = arith.select %371, %361, %319 : vector<2x32xi1>, vector<2x32xf32>
    %373 = arith.maximumf %323, %364 : vector<2x32xf32>
    %374 = vector.shape_cast %366 : vector<2x1xi1> to vector<2x1xi1>
    %375 = vector.broadcast %374 : vector<2x1xi1> to vector<2x32xi1>
    %376 = arith.select %375, %373, %323 : vector<2x32xi1>, vector<2x32xf32>
    %377 = vector.extract_strided_slice %354 {offsets = [0, 160], sizes = [2, 32], strides = [1, 1]} : vector<2x256xf32> to vector<2x32xf32>
    %378 = arith.mulf %377, %340 : vector<2x32xf32>
    %379 = vector.extract_strided_slice %354 {offsets = [0, 128], sizes = [2, 32], strides = [1, 1]} : vector<2x256xf32> to vector<2x32xf32>
    %380 = vector.extract_strided_slice %355 {offsets = [0, 192], sizes = [2, 32], strides = [1, 1]} : vector<2x256xf32> to vector<2x32xf32>
    %381 = arith.mulf %379, %380 : vector<2x32xf32>
    %382 = arith.addf %378, %381 : vector<2x32xf32>
    %383 = vector.extract_strided_slice %354 {offsets = [0, 224], sizes = [2, 32], strides = [1, 1]} : vector<2x256xf32> to vector<2x32xf32>
    %384 = math.tanh %382 : vector<2x32xf32>
    %385 = arith.mulf %383, %384 : vector<2x32xf32>
    %c1_i32_31 = arith.constant 1 : i32
    %386 = vector.broadcast %c1_i32_31 : i32 to vector<2x1xi32>
    %387 = arith.cmpi sgt, %0, %386 : vector<2x1xi32>
    %388 = vector.shape_cast %387 : vector<2x1xi1> to vector<2x1xi1>
    %389 = vector.broadcast %388 : vector<2x1xi1> to vector<2x32xi1>
    %390 = arith.select %389, %385, %337 : vector<2x32xi1>, vector<2x32xf32>
    %391 = vector.shape_cast %387 : vector<2x1xi1> to vector<2x1xi1>
    %392 = vector.broadcast %391 : vector<2x1xi1> to vector<2x32xi1>
    %393 = arith.select %392, %382, %340 : vector<2x32xi1>, vector<2x32xf32>
    %394 = arith.maximumf %344, %385 : vector<2x32xf32>
    %395 = vector.shape_cast %387 : vector<2x1xi1> to vector<2x1xi1>
    %396 = vector.broadcast %395 : vector<2x1xi1> to vector<2x32xi1>
    %397 = arith.select %396, %394, %344 : vector<2x32xi1>, vector<2x32xf32>
    %398 = tpu.concatenate %369, %390 in 1 : vector<2x32xf32>, vector<2x32xf32> -> vector<2x64xf32>
    %399 = arith.truncf %398 : vector<2x64xf32> to vector<2x64xbf16>
    %cst_32 = arith.constant dense<0.000000e+00> : vector<2x256xf32>
    %400 = tpu.matmul %399, %24, %cst_32 {dimension_numbers = #tpu.dot_dimension_numbers<[1], [0], [0], [1], [0, 0, 1, 1], [], []>} : vector<2x64xbf16>, vector<64x256xbf16>, vector<2x256xf32> -> vector<2x256xf32>
    %401 = tpu.concatenate %15, %16 in 1 : vector<2x128xf32>, vector<2x128xf32> -> vector<2x256xf32>
    %402 = arith.addf %401, %400 : vector<2x256xf32>
    %403 = arith.negf %402 : vector<2x256xf32>
    %404 = math.exp %403 : vector<2x256xf32>
    %cst_33 = arith.constant 1.000000e+00 : f32
    %405 = vector.broadcast %cst_33 : f32 to vector<2x256xf32>
    %406 = arith.addf %405, %404 : vector<2x256xf32>
    %407 = arith.divf %405, %406 : vector<2x256xf32>
    %408 = math.tanh %402 : vector<2x256xf32>
    %409 = vector.extract_strided_slice %407 {offsets = [0, 32], sizes = [2, 32], strides = [1, 1]} : vector<2x256xf32> to vector<2x32xf32>
    %410 = arith.mulf %409, %372 : vector<2x32xf32>
    %411 = vector.extract_strided_slice %407 {offsets = [0, 0], sizes = [2, 32], strides = [1, 1]} : vector<2x256xf32> to vector<2x32xf32>
    %412 = vector.extract_strided_slice %408 {offsets = [0, 64], sizes = [2, 32], strides = [1, 1]} : vector<2x256xf32> to vector<2x32xf32>
    %413 = arith.mulf %411, %412 : vector<2x32xf32>
    %414 = arith.addf %410, %413 : vector<2x32xf32>
    %415 = vector.extract_strided_slice %407 {offsets = [0, 96], sizes = [2, 32], strides = [1, 1]} : vector<2x256xf32> to vector<2x32xf32>
    %416 = math.tanh %414 : vector<2x32xf32>
    %417 = arith.mulf %415, %416 : vector<2x32xf32>
    %c7_i32_34 = arith.constant 7 : i32
    %418 = vector.broadcast %c7_i32_34 : i32 to vector<2x1xi32>
    %419 = arith.cmpi sgt, %0, %418 : vector<2x1xi32>
    %420 = arith.maximumf %376, %417 : vector<2x32xf32>
    %421 = vector.shape_cast %419 : vector<2x1xi1> to vector<2x1xi1>
    %422 = vector.broadcast %421 : vector<2x1xi1> to vector<2x32xi1>
    %423 = arith.select %422, %420, %376 : vector<2x32xi1>, vector<2x32xf32>
    %424 = vector.extract_strided_slice %407 {offsets = [0, 160], sizes = [2, 32], strides = [1, 1]} : vector<2x256xf32> to vector<2x32xf32>
    %425 = arith.mulf %424, %393 : vector<2x32xf32>
    %426 = vector.extract_strided_slice %407 {offsets = [0, 128], sizes = [2, 32], strides = [1, 1]} : vector<2x256xf32> to vector<2x32xf32>
    %427 = vector.extract_strided_slice %408 {offsets = [0, 192], sizes = [2, 32], strides = [1, 1]} : vector<2x256xf32> to vector<2x32xf32>
    %428 = arith.mulf %426, %427 : vector<2x32xf32>
    %429 = arith.addf %425, %428 : vector<2x32xf32>
    %430 = vector.extract_strided_slice %407 {offsets = [0, 224], sizes = [2, 32], strides = [1, 1]} : vector<2x256xf32> to vector<2x32xf32>
    %431 = math.tanh %429 : vector<2x32xf32>
    %432 = arith.mulf %430, %431 : vector<2x32xf32>
    %c0_i32_35 = arith.constant 0 : i32
    %433 = vector.broadcast %c0_i32_35 : i32 to vector<2x1xi32>
    %434 = arith.cmpi sgt, %0, %433 : vector<2x1xi32>
    %435 = arith.maximumf %397, %432 : vector<2x32xf32>
    %436 = vector.shape_cast %434 : vector<2x1xi1> to vector<2x1xi1>
    %437 = vector.broadcast %436 : vector<2x1xi1> to vector<2x32xi1>
    %438 = arith.select %437, %435, %397 : vector<2x32xi1>, vector<2x32xf32>
    %439 = vector.broadcast %1 : i32 to vector<2x1xi32>
    %440 = arith.cmpi slt, %0, %439 : vector<2x1xi32>
    %cst_36 = arith.constant 0.000000e+00 : f32
    %441 = vector.broadcast %cst_36 : f32 to vector<2x32xf32>
    %442 = arith.maximumf %423, %441 : vector<2x32xf32>
    %443 = vector.shape_cast %440 : vector<2x1xi1> to vector<2x1xi1>
    %444 = vector.broadcast %443 : vector<2x1xi1> to vector<2x32xi1>
    %445 = arith.select %444, %442, %423 : vector<2x32xi1>, vector<2x32xf32>
    %cst_37 = arith.constant 0.000000e+00 : f32
    %446 = vector.broadcast %cst_37 : f32 to vector<2x32xf32>
    %447 = arith.maximumf %438, %446 : vector<2x32xf32>
    %448 = vector.shape_cast %440 : vector<2x1xi1> to vector<2x1xi1>
    %449 = vector.broadcast %448 : vector<2x1xi1> to vector<2x32xi1>
    %450 = arith.select %449, %447, %438 : vector<2x32xi1>, vector<2x32xf32>
    %451 = tpu.concatenate %445, %450 in 1 : vector<2x32xf32>, vector<2x32xf32> -> vector<2x64xf32>
    %452 = arith.truncf %451 : vector<2x64xf32> to vector<2x64xbf16>
    %c0_38 = arith.constant 0 : index
    %c0_39 = arith.constant 0 : index
    %453 = vector.load %arg6[%c0_38, %c0_39] : memref<64x64xbf16, #tpu.memory_space<vmem>>, vector<64x64xbf16>
    %cst_40 = arith.constant dense<0.000000e+00> : vector<2x64xf32>
    %454 = tpu.matmul %452, %453, %cst_40 {dimension_numbers = #tpu.dot_dimension_numbers<[1], [0], [0], [1], [0, 0, 1, 1], [], []>} : vector<2x64xbf16>, vector<64x64xbf16>, vector<2x64xf32> -> vector<2x64xf32>
    %c0_41 = arith.constant 0 : index
    %c0_42 = arith.constant 0 : index
    %455 = vector.load %arg7[%c0_41, %c0_42] : memref<1x64xf32, #tpu.memory_space<vmem>>, vector<1x64xf32>
    %456 = vector.broadcast %455 : vector<1x64xf32> to vector<2x64xf32>
    %457 = arith.addf %454, %456 : vector<2x64xf32>
    %cst_43 = arith.constant 0.000000e+00 : f32
    %458 = vector.broadcast %cst_43 : f32 to vector<2x64xf32>
    %459 = arith.maximumf %457, %458 : vector<2x64xf32>
    %c0_44 = arith.constant 0 : index
    %c0_45 = arith.constant 0 : index
    %460 = vector.load %arg8[%c0_44, %c0_45] : memref<64x4xf32, #tpu.memory_space<vmem>>, vector<64x4xf32>
    %cst_46 = arith.constant dense<0.000000e+00> : vector<2x4xf32>
    %461 = tpu.matmul %459, %460, %cst_46 {dimension_numbers = #tpu.dot_dimension_numbers<[1], [0], [0], [1], [0, 0, 1, 1], [], []>} : vector<2x64xf32>, vector<64x4xf32>, vector<2x4xf32> -> vector<2x4xf32>
    %c0_47 = arith.constant 0 : index
    %c0_48 = arith.constant 0 : index
    %462 = vector.load %arg9[%c0_47, %c0_48] : memref<1x4xf32, #tpu.memory_space<vmem>>, vector<1x4xf32>
    %463 = vector.broadcast %462 : vector<1x4xf32> to vector<2x4xf32>
    %464 = arith.addf %461, %463 : vector<2x4xf32>
    %cst_49 = arith.constant 1.000000e+00 : f32
    %465 = vector.broadcast %cst_49 : f32 to vector<2x4xf32>
    %466 = arith.mulf %464, %465 : vector<2x4xf32>
    %cst_50 = arith.constant dense<0xFF800000> : vector<2xf32>
    %467 = vector.multi_reduction <maximumf>, %466, %cst_50 [1] : vector<2x4xf32> to vector<2xf32>
    %468 = vector.shape_cast %467 : vector<2xf32> to vector<2x1xf32>
    %469 = vector.broadcast %468 : vector<2x1xf32> to vector<2x4xf32>
    %470 = arith.subf %466, %469 : vector<2x4xf32>
    %471 = math.exp %470 : vector<2x4xf32>
    %cst_51 = arith.constant dense<0.000000e+00> : vector<2xf32>
    %472 = vector.multi_reduction <add>, %471, %cst_51 [1] : vector<2x4xf32> to vector<2xf32>
    %473 = vector.shape_cast %472 : vector<2xf32> to vector<2x1xf32>
    %474 = math.log %473 : vector<2x1xf32>
    %475 = arith.addf %474, %468 : vector<2x1xf32>
    %476 = vector.broadcast %475 : vector<2x1xf32> to vector<2x4xf32>
    %477 = arith.subf %466, %476 : vector<2x4xf32>
    %c0_52 = arith.constant 0 : index
    %c0_53 = arith.constant 0 : index
    %478 = vector.load %arg10[%c0_52, %c0_53] : memref<2x4xf32, #tpu.memory_space<vmem>>, vector<2x4xf32>
    tpu.vector_store %arg10[%c0_52, %c0_53], %477 {strides = array<i32>} : memref<2x4xf32, #tpu.memory_space<vmem>>, vector<2x4xf32>,
    return
  }
}

</mosaic_0001>

<llo_original>
// kernel: tpu_custom_call.1
$region0: #{tpu_custom_call.1}
  #allocation0 [shape = 'u32[]', space=smem, size = 0x4, offset = 0x4, fixed_abs, tag = 'smem constant byte address 0x4 - core index']
  #allocation1 [shape = 'u32[72,128]{1,0:T(1,128)}', space=vmem, size = 0x9000, scoped, tag = 'internal scratch']
  #allocation2 [shape = 's32[1]{0:T(128)S(6)}', space=smem, size = 0x200, scoped, tag = 'scoped memory for tpu_custom_call.1']
  %s0 = inlined_call_operand.<no memory space> [shape: s32[1], index: 0, kind: input, shape index: {}]
  %s1 = inlined_call_operand.vmem [shape: s32[2,1], index: 1, kind: input, shape index: {}]
  %s2 = inlined_call_operand.hbm [shape: bf16[16,32], index: 2, kind: input, shape index: {}]
  %s3 = inlined_call_operand.hbm [shape: bf16[32,256], index: 3, kind: input, shape index: {}]
  %s4 = inlined_call_operand.vmem [shape: f32[1,256], index: 4, kind: input, shape index: {}]
  %s5 = inlined_call_operand.vmem [shape: bf16[64,256], index: 5, kind: input, shape index: {}]
  %s6 = inlined_call_operand.hbm [shape: bf16[64,64], index: 6, kind: input, shape index: {}]
  %s7 = inlined_call_operand.vmem [shape: f32[1,64], index: 7, kind: input, shape index: {}]
  %s8 = inlined_call_operand.vmem [shape: f32[64,4], index: 8, kind: input, shape index: {}]
  %s9 = inlined_call_operand.vmem [shape: f32[1,4], index: 9, kind: input, shape index: {}]
  %s10 = inlined_call_operand.hbm [shape: f32[2,4], index: 10, kind: output, shape index: {}]
  %s11 = sld [smem:[#allocation0]]
  $region62: #{tpu_custom_call.1} parent=0
    _
  %s13 = ssub.s32 1, %s11
  %s14 = scalar_select 0, %s13, %s11
  %15 = sst [smem:[#allocation2]] %s0
  $region1: #{tpu_custom_call.1} parent=0
    #allocation3 [shape = 'u8[4096]{0}', space=vmem, size = 0x1000, scoped, tag = 'input window, operand 2, single buffered']
    #allocation4 [shape = 's32[1]{0}', space=sflag, size = 0x4, scoped, tag = 'scoped memory for tpu_custom_call.1']
    #allocation5 [shape = 's32[1]{0}', space=sflag, size = 0x4, scoped, tag = 'scoped memory for tpu_custom_call.1']
    #allocation6 [shape = 'u8[16384]{0}', space=vmem, size = 0x4000, scoped, tag = 'input window, operand 3, single buffered']
    #allocation7 [shape = 's32[1]{0}', space=sflag, size = 0x4, scoped, tag = 'scoped memory for tpu_custom_call.1']
    #allocation8 [shape = 'u8[16384]{0}', space=vmem, size = 0x4000, scoped, tag = 'input window, operand 6, single buffered']
    #allocation9 [shape = 'u8[1024]{0}', space=vmem, size = 0x400, scoped, tag = 'output window, operand 0, single buffered']
    %16 = vsyncpa [#allocation4], 0
    %17 = vsyncpa [#allocation7], 0
    %18 = vsyncpa [#allocation5], 0
    // Predicated region
    $region2: #{tpu_custom_call.1} parent=1 // pred_check
      _
    $region3: #{tpu_custom_call.1} parent=1 // pred_check_branch
      %20 = sbr.rel (0) target = $region5
    $region4: #{tpu_custom_call.1} parent=1 // pred_region
      _
    $region5: #{tpu_custom_call.1} parent=1 // pred_fallthru
      _
    // Predicated region
    $region6: #{tpu_custom_call.1} parent=1 // pred_check
      _
    $region7: #{tpu_custom_call.1} parent=1 // pred_check_branch
      %22 = sbr.rel (0) target = $region9
    $region8: #{tpu_custom_call.1} parent=1 // pred_region
      _
    $region9: #{tpu_custom_call.1} parent=1 // pred_fallthru
      _
    // Predicated region
    $region10: #{tpu_custom_call.1} parent=1 // pred_check
      _
    $region11: #{tpu_custom_call.1} parent=1 // pred_check_branch
      %24 = sbr.rel (0) target = $region13
    $region12: #{tpu_custom_call.1} parent=1 // pred_region
      %26 = vsyncadd [#allocation4], 0
      %s27 = sshll.u32 %s2, 4
      %s28 = int_to_ptr.hbm [resolvable:$true] %s27
      %s29 = sshll.u32 [#allocation3], 4
      %s30 = int_to_ptr.vmem [resolvable:$true] %s29
      %35 = dma.hbm_to_vmem [thread:$0]  %s28, 128, %s30, [#allocation4], 64, 64, 4
    $region13: #{tpu_custom_call.1} parent=1 // pred_fallthru
      _
    // Predicated region
    $region14: #{tpu_custom_call.1} parent=1 // pred_check
      _
    $region15: #{tpu_custom_call.1} parent=1 // pred_check_branch
      %37 = sbr.rel (0) target = $region17
    $region16: #{tpu_custom_call.1} parent=1 // pred_region
      %39 = vsyncadd [#allocation7], 0
      %s40 = sshll.u32 %s3, 4
      %s41 = int_to_ptr.hbm [resolvable:$true] %s40
      %s42 = sshll.u32 [#allocation6], 4
      %s43 = int_to_ptr.vmem [resolvable:$true] %s42
      %48 = dma.hbm_to_vmem [thread:$0]  %s41, 512, %s43, [#allocation7], 128, 128, 8
    $region17: #{tpu_custom_call.1} parent=1 // pred_fallthru
      _
    // Predicated region
    $region18: #{tpu_custom_call.1} parent=1 // pred_check
      _
    $region19: #{tpu_custom_call.1} parent=1 // pred_check_branch
      %50 = sbr.rel (0) target = $region21
    $region20: #{tpu_custom_call.1} parent=1 // pred_region
      _
    $region21: #{tpu_custom_call.1} parent=1 // pred_fallthru
      _
    // Predicated region
    $region22: #{tpu_custom_call.1} parent=1 // pred_check
      _
    $region23: #{tpu_custom_call.1} parent=1 // pred_check_branch
      %52 = sbr.rel (0) target = $region25
    $region24: #{tpu_custom_call.1} parent=1 // pred_region
      _
    $region25: #{tpu_custom_call.1} parent=1 // pred_fallthru
      _
    // Predicated region
    $region26: #{tpu_custom_call.1} parent=1 // pred_check
      _
    $region27: #{tpu_custom_call.1} parent=1 // pred_check_branch
      %54 = sbr.rel (0) target = $region29
    $region28: #{tpu_custom_call.1} parent=1 // pred_region
      %56 = vsyncadd [#allocation7], 0
      %s57 = sshll.u32 %s6, 4
      %s58 = int_to_ptr.hbm [resolvable:$true] %s57
      %s59 = sshll.u32 [#allocation8], 4
      %s60 = int_to_ptr.vmem [resolvable:$true] %s59
      %65 = dma.hbm_to_vmem [thread:$0]  %s58, 512, %s60, [#allocation7], 64, 64, 4
    $region29: #{tpu_custom_call.1} parent=1 // pred_fallthru
      _
    // Predicated region
    $region30: #{tpu_custom_call.1} parent=1 // pred_check
      _
    $region31: #{tpu_custom_call.1} parent=1 // pred_check_branch
      %67 = sbr.rel (0) target = $region33
    $region32: #{tpu_custom_call.1} parent=1 // pred_region
      _
    $region33: #{tpu_custom_call.1} parent=1 // pred_fallthru
      _
    // Predicated region
    $region34: #{tpu_custom_call.1} parent=1 // pred_check
      _
    $region35: #{tpu_custom_call.1} parent=1 // pred_check_branch
      %69 = sbr.rel (0) target = $region37
    $region36: #{tpu_custom_call.1} parent=1 // pred_region
      _
    $region37: #{tpu_custom_call.1} parent=1 // pred_fallthru
      _
    // Predicated region
    $region38: #{tpu_custom_call.1} parent=1 // pred_check
      _
    $region39: #{tpu_custom_call.1} parent=1 // pred_check_branch
      %71 = sbr.rel (0) target = $region41
    $region40: #{tpu_custom_call.1} parent=1 // pred_region
      _
    $region41: #{tpu_custom_call.1} parent=1 // pred_fallthru
      _
    // Predicated region
    $region42: #{tpu_custom_call.1} parent=1 // pred_check
      _
    $region43: #{tpu_custom_call.1} parent=1 // pred_check_branch
      %73 = sbr.rel (0) target = $region45
    $region44: #{tpu_custom_call.1} parent=1 // pred_region
      %75 = dma.done [#allocation4], 128
    $region45: #{tpu_custom_call.1} parent=1 // pred_fallthru
      _
    // Predicated region
    $region46: #{tpu_custom_call.1} parent=1 // pred_check
      _
    $region47: #{tpu_custom_call.1} parent=1 // pred_check_branch
      %77 = sbr.rel (0) target = $region49
    $region48: #{tpu_custom_call.1} parent=1 // pred_region
      %79 = dma.done [#allocation7], 512
    $region49: #{tpu_custom_call.1} parent=1 // pred_fallthru
      _
    // Predicated region
    $region50: #{tpu_custom_call.1} parent=1 // pred_check
      _
    $region51: #{tpu_custom_call.1} parent=1 // pred_check_branch
      %81 = sbr.rel (0) target = $region53
    $region52: #{tpu_custom_call.1} parent=1 // pred_region
      %83 = dma.done [#allocation7], 512
    $region53: #{tpu_custom_call.1} parent=1 // pred_fallthru
      _
    %v85 = vld [vmem:[%s1] sm:$0x3]
    %s86 = sld [smem:[#allocation2]]
    %v87 = vld [vmem:[#allocation3] sm:$0xf]
    %v88 = vld [vmem:[#allocation3 + $0x4] sm:$0xf]
    %v89 = vld [vmem:[#allocation6] sm:$0xff]
    %v90 = vld [vmem:[#allocation6 + $0x8] sm:$0xff]
    %v91 = vld [vmem:[#allocation6 + $0x10] sm:$0xff]
    %v92 = vld [vmem:[#allocation6 + $0x18] sm:$0xff]
    %v93 = vld [vmem:[%s4] sm:$0x3]
    %v95 = vperm.slane %v93, 0
    %v96 = vperm.slane %v93, 1
    %v101 = vunpack.c.l.b16 %v87
    %v102 = vunpack.c.l.b16 %v88
    %v103 = vpack.c.b16 %v102, %v101
    %v108 = vunpack.c.l.b16 %v89
    %v109 = vunpack.c.h.b16 %v89
    %v110 = vunpack.c.l.b16 %v90
    %v111 = vunpack.c.h.b16 %v90
    %v112 = vunpack.c.l.b16 %v91
    %v113 = vunpack.c.h.b16 %v91
    %v114 = vunpack.c.l.b16 %v92
    %v115 = vunpack.c.h.b16 %v92
    %v116 = vpack.c.b16 %v110, %v108
    %v117 = vpack.c.b16 %v111, %v109
    %v118 = vpack.c.b16 %v114, %v112
    %v119 = vpack.c.b16 %v115, %v113
    %vm124 = vcmask 261120
    %v126 = vsel %vm124, %v103, 0
    %128 = vmatpush.bf16.msra.mxu0 0
    %129 = vmatpush.bf16.msra.mxu0 0
    %130 = vmatpush.bf16.msra.mxu0 0
    %131 = vmatpush.bf16.msra.mxu0 0
    %132 = vmatpush.bf16.msra.mxu0 0
    %133 = vmatpush.bf16.msra.mxu0 0
    %134 = vmatpush.bf16.msra.mxu0 %v118
    %135 = vmatpush.bf16.msra.mxu0 %v116
    %136 = vmatmul.bf16.gmra.mxu0 %v126
    %v137 = vpop.f32.mrf.mxu0
    %v138 = vadd.f32 %v95, %v137
    %v139 = vpop.f32.mrf.mxu0
    %v140 = vadd.f32 %v95, %v139
    %141 = vdwg.mxu0
    %142 = vmatpush.bf16.msra.mxu0 0
    %143 = vmatpush.bf16.msra.mxu0 0
    %144 = vmatpush.bf16.msra.mxu0 0
    %145 = vmatpush.bf16.msra.mxu0 0
    %146 = vmatpush.bf16.msra.mxu0 0
    %147 = vmatpush.bf16.msra.mxu0 0
    %148 = vmatpush.bf16.msra.mxu0 %v119
    %149 = vmatpush.bf16.msra.mxu0 %v117
    %150 = vmatmul.bf16.gmra.mxu0 %v126
    %v151 = vpop.f32.mrf.mxu0
    %v152 = vadd.f32 %v96, %v151
    %v153 = vpop.f32.mrf.mxu0
    %v154 = vadd.f32 %v96, %v153
    %155 = vdwg.mxu0
    %v156 = vld [vmem:[%s5] sm:$0xff]
    %v157 = vld [vmem:[%s5 + $0x8] sm:$0xff]
    %v158 = vld [vmem:[%s5 + $0x10] sm:$0xff]
    %v159 = vld [vmem:[%s5 + $0x18] sm:$0xff]
    %v160 = vld [vmem:[%s5 + $0x20] sm:$0xff]
    %v161 = vld [vmem:[%s5 + $0x28] sm:$0xff]
    %v162 = vld [vmem:[%s5 + $0x30] sm:$0xff]
    %v163 = vld [vmem:[%s5 + $0x38] sm:$0xff]
    %v164 = vpack.c.bf16 0.0, 0.0
    %v173 = vunpack.c.l.b16 %v156
    %v174 = vunpack.c.h.b16 %v156
    %v175 = vunpack.c.l.b16 %v157
    %v176 = vunpack.c.h.b16 %v157
    %v177 = vunpack.c.l.b16 %v158
    %v178 = vunpack.c.h.b16 %v158
    %v179 = vunpack.c.l.b16 %v159
    %v180 = vunpack.c.h.b16 %v159
    %v181 = vunpack.c.l.b16 %v160
    %v182 = vunpack.c.h.b16 %v160
    %v183 = vunpack.c.l.b16 %v161
    %v184 = vunpack.c.h.b16 %v161
    %v185 = vunpack.c.l.b16 %v162
    %v186 = vunpack.c.h.b16 %v162
    %v187 = vunpack.c.l.b16 %v163
    %v188 = vunpack.c.h.b16 %v163
    %v189 = vpack.c.b16 %v175, %v173
    %v190 = vpack.c.b16 %v176, %v174
    %v191 = vpack.c.b16 %v179, %v177
    %v192 = vpack.c.b16 %v180, %v178
    %v193 = vpack.c.b16 %v183, %v181
    %v194 = vpack.c.b16 %v184, %v182
    %v195 = vpack.c.b16 %v187, %v185
    %v196 = vpack.c.b16 %v188, %v186
    %vm205 = vcmask 523264
    %v207 = vsel %vm205, %v164, 0
    %209 = vmatpush.bf16.msra.mxu0 0
    %210 = vmatpush.bf16.msra.mxu0 0
    %211 = vmatpush.bf16.msra.mxu0 0
    %212 = vmatpush.bf16.msra.mxu0 0
    %213 = vmatpush.bf16.msra.mxu0 %v195
    %214 = vmatpush.bf16.msra.mxu0 %v193
    %215 = vmatpush.bf16.msra.mxu0 %v191
    %216 = vmatpush.bf16.msra.mxu0 %v189
    %217 = vmatmul.bf16.gmra.mxu0 %v207
    %v218 = vpop.f32.mrf.mxu0
    %v219 = vadd.f32 0.0, %v218
    %v220 = vpop.f32.mrf.mxu0
    %221 = vdwg.mxu0
    %222 = vmatpush.bf16.msra.mxu0 0
    %223 = vmatpush.bf16.msra.mxu0 0
    %224 = vmatpush.bf16.msra.mxu0 0
    %225 = vmatpush.bf16.msra.mxu0 0
    %226 = vmatpush.bf16.msra.mxu0 %v196
    %227 = vmatpush.bf16.msra.mxu0 %v194
    %228 = vmatpush.bf16.msra.mxu0 %v192
    %229 = vmatpush.bf16.msra.mxu0 %v190
    %230 = vmatmul.bf16.gmra.mxu0 %v207
    %v231 = vpop.f32.mrf.mxu0
    %v232 = vadd.f32 0.0, %v231
    %v233 = vpop.f32.mrf.mxu0
    %234 = vdwg.mxu0
    %v236 = vrot.slane %v154, 6
    %v238 = vadd.f32 %v138, %v219
    %v239 = vadd.f32 %v236, %v232
    %v240 = vxor.u32 %v238, 2147483648
    %v241 = vxor.u32 %v239, 2147483648
    %v242 = vmul.f32 %v240, 1.442695
    %v243 = vpow.pop %v242
    %v244 = vmul.f32 %v241, 1.442695
    %v245 = vpow.pop %v244
    %v246 = vadd.f32 %v243, 1.0
    %v247 = vadd.f32 %v245, 1.0
    %v248 = vrcp.pop %v246
    %v249 = vmul.f32 %v246, %v248
    %v250 = vsub.f32 1.0, %v249
    %v251 = vmul.f32 %v248, %v250
    %v252 = vadd.f32 %v248, %v251
    %vm253 = vweird.f32 %v246
    %vm254 = vweird.f32 %v248
    %vm255 = vmor %vm253, %vm254
    %v256 = vsel %vm255, %v248, %v252
    %v257 = vand.u32 2147483647, %v246
    %vm258 = vcmp.eq.f32.partialorder %v257, 8.507059e+37
    %v259 = vand.u32 %v246, 2147483648
    %v260 = vor.u32 1.1754944e-38, %v259
    %v261 = vsel %vm258, %v260, %v256
    %v262 = vmul.f32 1.0, %v261
    %v263 = vrcp.pop %v247
    %v264 = vmul.f32 %v247, %v263
    %v265 = vsub.f32 1.0, %v264
    %v266 = vmul.f32 %v263, %v265
    %v267 = vadd.f32 %v263, %v266
    %vm268 = vweird.f32 %v247
    %vm269 = vweird.f32 %v263
    %vm270 = vmor %vm268, %vm269
    %v271 = vsel %vm270, %v263, %v267
    %v272 = vand.u32 2147483647, %v247
    %vm273 = vcmp.eq.f32.partialorder %v272, 8.507059e+37
    %v274 = vand.u32 %v247, 2147483648
    %v275 = vor.u32 1.1754944e-38, %v274
    %v276 = vsel %vm273, %v275, %v271
    %v277 = vmul.f32 1.0, %v276
    %v278 = vtanh.pop %v238
    %v279 = vtanh.pop %v239
    %v280 = vmul.f32 %v262, 0.0
    %282 = vrot.lane.b32.xlu0 %v278, 64
    %v283 = vpop.permute.xlu0 %282
    %v285 = vmul.f32 %v262, %v283
    %287 = vrot.lane.b32.xlu0 %v285, 32
    %v288 = vpop.permute.xlu0 %287
    %v290 = vadd.f32 %v280, %v288
    %v291 = vtanh.pop %v290
    %293 = vrot.lane.b32.xlu0 %v291, 64
    %v294 = vpop.permute.xlu0 %293
    %v296 = vmul.f32 %v262, %v294
    %vm297 = vcmp.gt.s32.totalorder %v85, 0
    %v298 = vsel %vm297, 1, 0
    %299 = vset.pattern.permute.xlu0 0
    %300 = vperm.xlu0 %299, %v298
    %v301 = vpop.permute.xlu0 %300
    %vm302 = vcmp.eq.s32.totalorder %v301, 1
    %v303 = vsel %vm302, %v296, 0.0
    %v304 = vsel %vm302, %v290, 0.0
    %v305 = vsel %vm302, %v296, -inf
    %v306 = vmul.f32 %v277, 0.0
    %308 = vrot.lane.b32.xlu0 %v279, 64
    %v309 = vpop.permute.xlu0 %308
    %v311 = vmul.f32 %v277, %v309
    %313 = vrot.lane.b32.xlu0 %v311, 32
    %v314 = vpop.permute.xlu0 %313
    %v316 = vadd.f32 %v306, %v314
    %v317 = vtanh.pop %v316
    %319 = vrot.lane.b32.xlu0 %v317, 64
    %v320 = vpop.permute.xlu0 %319
    %v322 = vmul.f32 %v277, %v320
    %vm323 = vcmp.gt.s32.totalorder %v85, 7
    %v324 = vsel %vm323, 1, 0
    %325 = vset.pattern.permute.xlu0 0
    %326 = vperm.xlu0 %325, %v324
    %v327 = vpop.permute.xlu0 %326
    %vm328 = vcmp.eq.s32.totalorder %v327, 1
    %v329 = vsel %vm328, %v322, 0.0
    %v330 = vsel %vm328, %v316, 0.0
    %v331 = vsel %vm328, %v322, -inf
    %333 = vrot.lane.b32.xlu0 %v303, 32
    %v334 = vpop.permute.xlu0 %333
    %337 = vrot.lane.b32.xlu0 %v329, 64
    %v338 = vpop.permute.xlu0 %337
    %v340 = vsel %vm124, %v334, %v338
    %v341 = vpack.c.bf16 %v340, %v340
    %v343 = vsel %vm205, %v341, 0
    %345 = vmatpush.bf16.msra.mxu0 0
    %346 = vmatpush.bf16.msra.mxu0 0
    %347 = vmatpush.bf16.msra.mxu0 0
    %348 = vmatpush.bf16.msra.mxu0 0
    %349 = vmatpush.bf16.msra.mxu0 %v195
    %350 = vmatpush.bf16.msra.mxu0 %v193
    %351 = vmatpush.bf16.msra.mxu0 %v191
    %352 = vmatpush.bf16.msra.mxu0 %v189
    %353 = vmatmul.bf16.gmra.mxu0 %v343
    %v354 = vpop.f32.mrf.mxu0
    %v355 = vadd.f32 0.0, %v354
    %v356 = vpop.f32.mrf.mxu0
    %357 = vdwg.mxu0
    %358 = vmatpush.bf16.msra.mxu0 0
    %359 = vmatpush.bf16.msra.mxu0 0
    %360 = vmatpush.bf16.msra.mxu0 0
    %361 = vmatpush.bf16.msra.mxu0 0
    %362 = vmatpush.bf16.msra.mxu0 %v196
    %363 = vmatpush.bf16.msra.mxu0 %v194
    %364 = vmatpush.bf16.msra.mxu0 %v192
    %365 = vmatpush.bf16.msra.mxu0 %v190
    %366 = vmatmul.bf16.gmra.mxu0 %v343
    %v367 = vpop.f32.mrf.mxu0
    %v368 = vadd.f32 0.0, %v367
    %v369 = vpop.f32.mrf.mxu0
    %370 = vdwg.mxu0
    %v371 = vrot.slane %v154, 2
    %v375 = vrot.slane %v355, 6
    %v376 = vrot.slane %v368, 6
    %v379 = vadd.f32 %v138, %v375
    %v380 = vadd.f32 %v371, %v376
    %v381 = vxor.u32 %v379, 2147483648
    %v382 = vxor.u32 %v380, 2147483648
    %v383 = vmul.f32 %v381, 1.442695
    %v384 = vpow.pop %v383
    %v385 = vmul.f32 %v382, 1.442695
    %v386 = vpow.pop %v385
    %v387 = vadd.f32 %v384, 1.0
    %v388 = vadd.f32 %v386, 1.0
    %v389 = vrcp.pop %v387
    %v390 = vmul.f32 %v387, %v389
    %v391 = vsub.f32 1.0, %v390
    %v392 = vmul.f32 %v389, %v391
    %v393 = vadd.f32 %v389, %v392
    %vm394 = vweird.f32 %v387
    %vm395 = vweird.f32 %v389
    %vm396 = vmor %vm394, %vm395
    %v397 = vsel %vm396, %v389, %v393
    %v398 = vand.u32 2147483647, %v387
    %vm399 = vcmp.eq.f32.partialorder %v398, 8.507059e+37
    %v400 = vand.u32 %v387, 2147483648
    %v401 = vor.u32 1.1754944e-38, %v400
    %v402 = vsel %vm399, %v401, %v397
    %v403 = vmul.f32 1.0, %v402
    %v404 = vrcp.pop %v388
    %v405 = vmul.f32 %v388, %v404
    %v406 = vsub.f32 1.0, %v405
    %v407 = vmul.f32 %v404, %v406
    %v408 = vadd.f32 %v404, %v407
    %vm409 = vweird.f32 %v388
    %vm410 = vweird.f32 %v404
    %vm411 = vmor %vm409, %vm410
    %v412 = vsel %vm411, %v404, %v408
    %v413 = vand.u32 2147483647, %v388
    %vm414 = vcmp.eq.f32.partialorder %v413, 8.507059e+37
    %v415 = vand.u32 %v388, 2147483648
    %v416 = vor.u32 1.1754944e-38, %v415
    %v417 = vsel %vm414, %v416, %v412
    %v418 = vmul.f32 1.0, %v417
    %v419 = vtanh.pop %v379
    %v420 = vtanh.pop %v380
    %v422 = vrot.slane %v304, 6
    %v424 = vmul.f32 %v403, %v422
    %426 = vrot.lane.b32.xlu0 %v419, 64
    %v427 = vpop.permute.xlu0 %426
    %v429 = vmul.f32 %v403, %v427
    %431 = vrot.lane.b32.xlu0 %v429, 32
    %v432 = vpop.permute.xlu0 %431
    %v434 = vadd.f32 %v424, %v432
    %v435 = vtanh.pop %v434
    %437 = vrot.lane.b32.xlu0 %v435, 64
    %v438 = vpop.permute.xlu0 %437
    %v440 = vmul.f32 %v403, %v438
    %vm441 = vcmp.gt.s32.totalorder %v85, 1
    %v442 = vsel %vm441, 1, 0
    %443 = vset.pattern.permute.xlu0 0
    %444 = vperm.xlu0 %443, %v442
    %v445 = vpop.permute.xlu0 %444
    %vm446 = vcmp.eq.s32.totalorder %v445, 1
    %v448 = vrot.slane %v440, 2
    %449 = vrot.lane.b32.xlu0 %v448, 32
    %v450 = vpop.permute.xlu0 %449
    %v452 = vsel %vm446, %v450, %v334
    %v454 = vrot.slane %v434, 2
    %455 = vrot.lane.b32.xlu0 %v454, 96
    %v456 = vpop.permute.xlu0 %455
    %458 = vrot.lane.b32.xlu0 %v304, 96
    %v459 = vpop.permute.xlu0 %458
    %v461 = vsel %vm446, %v456, %v459
    %v463 = vmax.f32 %v305, %v448
    %v464 = vsel %vm446, %v463, %v305
    %v466 = vrot.slane %v330, 6
    %v468 = vmul.f32 %v418, %v466
    %470 = vrot.lane.b32.xlu0 %v420, 64
    %v471 = vpop.permute.xlu0 %470
    %v473 = vmul.f32 %v418, %v471
    %475 = vrot.lane.b32.xlu0 %v473, 32
    %v476 = vpop.permute.xlu0 %475
    %v478 = vadd.f32 %v468, %v476
    %v479 = vtanh.pop %v478
    %481 = vrot.lane.b32.xlu0 %v479, 64
    %v482 = vpop.permute.xlu0 %481
    %v484 = vmul.f32 %v418, %v482
    %vm485 = vcmp.gt.s32.totalorder %v85, 6
    %v486 = vsel %vm485, 1, 0
    %487 = vset.pattern.permute.xlu0 0
    %488 = vperm.xlu0 %487, %v486
    %v489 = vpop.permute.xlu0 %488
    %vm490 = vcmp.eq.s32.totalorder %v489, 1
    %v492 = vrot.slane %v484, 2
    %493 = vrot.lane.b32.xlu0 %v492, 32
    %v494 = vpop.permute.xlu0 %493
    %496 = vrot.lane.b32.xlu0 %v329, 32
    %v497 = vpop.permute.xlu0 %496
    %v499 = vsel %vm490, %v494, %v497
    %v501 = vrot.slane %v478, 2
    %502 = vrot.lane.b32.xlu0 %v501, 96
    %v503 = vpop.permute.xlu0 %502
    %505 = vrot.lane.b32.xlu0 %v330, 96
    %v506 = vpop.permute.xlu0 %505
    %v508 = vsel %vm490, %v503, %v506
    %v510 = vmax.f32 %v331, %v492
    %v511 = vsel %vm490, %v510, %v331
    %513 = vrot.lane.b32.xlu0 %v499, 32
    %v514 = vpop.permute.xlu0 %513
    %v516 = vsel %vm124, %v452, %v514
    %v517 = vpack.c.bf16 %v516, %v516
    %v519 = vsel %vm205, %v517, 0
    %521 = vmatpush.bf16.msra.mxu0 0
    %522 = vmatpush.bf16.msra.mxu0 0
    %523 = vmatpush.bf16.msra.mxu0 0
    %524 = vmatpush.bf16.msra.mxu0 0
    %525 = vmatpush.bf16.msra.mxu0 %v195
    %526 = vmatpush.bf16.msra.mxu0 %v193
    %527 = vmatpush.bf16.msra.mxu0 %v191
    %528 = vmatpush.bf16.msra.mxu0 %v189
    %529 = vmatmul.bf16.gmra.mxu0 %v519
    %v530 = vpop.f32.mrf.mxu0
    %v531 = vadd.f32 0.0, %v530
    %v532 = vpop.f32.mrf.mxu0
    %533 = vdwg.mxu0
    %534 = vmatpush.bf16.msra.mxu0 0
    %535 = vmatpush.bf16.msra.mxu0 0
    %536 = vmatpush.bf16.msra.mxu0 0
    %537 = vmatpush.bf16.msra.mxu0 0
    %538 = vmatpush.bf16.msra.mxu0 %v196
    %539 = vmatpush.bf16.msra.mxu0 %v194
    %540 = vmatpush.bf16.msra.mxu0 %v192
    %541 = vmatpush.bf16.msra.mxu0 %v190
    %542 = vmatmul.bf16.gmra.mxu0 %v519
    %v543 = vpop.f32.mrf.mxu0
    %v544 = vadd.f32 0.0, %v543
    %v545 = vpop.f32.mrf.mxu0
    %546 = vdwg.mxu0
    %v549 = vrot.slane %v531, 4
    %v550 = vrot.slane %v544, 4
    %v553 = vadd.f32 %v138, %v549
    %v554 = vadd.f32 %v236, %v550
    %v555 = vxor.u32 %v553, 2147483648
    %v556 = vxor.u32 %v554, 2147483648
    %v557 = vmul.f32 %v555, 1.442695
    %v558 = vpow.pop %v557
    %v559 = vmul.f32 %v556, 1.442695
    %v560 = vpow.pop %v559
    %v561 = vadd.f32 %v558, 1.0
    %v562 = vadd.f32 %v560, 1.0
    %v563 = vrcp.pop %v561
    %v564 = vmul.f32 %v561, %v563
    %v565 = vsub.f32 1.0, %v564
    %v566 = vmul.f32 %v563, %v565
    %v567 = vadd.f32 %v563, %v566
    %vm568 = vweird.f32 %v561
    %vm569 = vweird.f32 %v563
    %vm570 = vmor %vm568, %vm569
    %v571 = vsel %vm570, %v563, %v567
    %v572 = vand.u32 2147483647, %v561
    %vm573 = vcmp.eq.f32.partialorder %v572, 8.507059e+37
    %v574 = vand.u32 %v561, 2147483648
    %v575 = vor.u32 1.1754944e-38, %v574
    %v576 = vsel %vm573, %v575, %v571
    %v577 = vmul.f32 1.0, %v576
    %v578 = vrcp.pop %v562
    %v579 = vmul.f32 %v562, %v578
    %v580 = vsub.f32 1.0, %v579
    %v581 = vmul.f32 %v578, %v580
    %v582 = vadd.f32 %v578, %v581
    %vm583 = vweird.f32 %v562
    %vm584 = vweird.f32 %v578
    %vm585 = vmor %vm583, %vm584
    %v586 = vsel %vm585, %v578, %v582
    %v587 = vand.u32 2147483647, %v562
    %vm588 = vcmp.eq.f32.partialorder %v587, 8.507059e+37
    %v589 = vand.u32 %v562, 2147483648
    %v590 = vor.u32 1.1754944e-38, %v589
    %v591 = vsel %vm588, %v590, %v586
    %v592 = vmul.f32 1.0, %v591
    %v593 = vtanh.pop %v553
    %v594 = vtanh.pop %v554
    %v596 = vrot.slane %v461, 4
    %597 = vrot.lane.b32.xlu0 %v596, 32
    %v598 = vpop.permute.xlu0 %597
    %v600 = vmul.f32 %v577, %v598
    %602 = vrot.lane.b32.xlu0 %v593, 64
    %v603 = vpop.permute.xlu0 %602
    %v605 = vmul.f32 %v577, %v603
    %607 = vrot.lane.b32.xlu0 %v605, 32
    %v608 = vpop.permute.xlu0 %607
    %v610 = vadd.f32 %v600, %v608
    %v611 = vtanh.pop %v610
    %613 = vrot.lane.b32.xlu0 %v611, 64
    %v614 = vpop.permute.xlu0 %613
    %v616 = vmul.f32 %v577, %v614
    %vm617 = vcmp.gt.s32.totalorder %v85, 2
    %v618 = vsel %vm617, 1, 0
    %619 = vset.pattern.permute.xlu0 0
    %620 = vperm.xlu0 %619, %v618
    %v621 = vpop.permute.xlu0 %620
    %vm622 = vcmp.eq.s32.totalorder %v621, 1
    %v624 = vrot.slane %v616, 4
    %625 = vrot.lane.b32.xlu0 %v624, 32
    %v626 = vpop.permute.xlu0 %625
    %v628 = vsel %vm622, %v626, %v452
    %v630 = vrot.slane %v610, 4
    %631 = vrot.lane.b32.xlu0 %v630, 96
    %v632 = vpop.permute.xlu0 %631
    %v634 = vsel %vm622, %v632, %v461
    %v636 = vmax.f32 %v464, %v624
    %v637 = vsel %vm622, %v636, %v464
    %v639 = vrot.slane %v508, 4
    %640 = vrot.lane.b32.xlu0 %v639, 32
    %v641 = vpop.permute.xlu0 %640
    %v643 = vmul.f32 %v592, %v641
    %645 = vrot.lane.b32.xlu0 %v594, 64
    %v646 = vpop.permute.xlu0 %645
    %v648 = vmul.f32 %v592, %v646
    %650 = vrot.lane.b32.xlu0 %v648, 32
    %v651 = vpop.permute.xlu0 %650
    %v653 = vadd.f32 %v643, %v651
    %v654 = vtanh.pop %v653
    %656 = vrot.lane.b32.xlu0 %v654, 64
    %v657 = vpop.permute.xlu0 %656
    %v659 = vmul.f32 %v592, %v657
    %vm660 = vcmp.gt.s32.totalorder %v85, 5
    %v661 = vsel %vm660, 1, 0
    %662 = vset.pattern.permute.xlu0 0
    %663 = vperm.xlu0 %662, %v661
    %v664 = vpop.permute.xlu0 %663
    %vm665 = vcmp.eq.s32.totalorder %v664, 1
    %v667 = vrot.slane %v659, 4
    %668 = vrot.lane.b32.xlu0 %v667, 32
    %v669 = vpop.permute.xlu0 %668
    %v671 = vsel %vm665, %v669, %v499
    %v673 = vrot.slane %v653, 4
    %674 = vrot.lane.b32.xlu0 %v673, 96
    %v675 = vpop.permute.xlu0 %674
    %v677 = vsel %vm665, %v675, %v508
    %v679 = vmax.f32 %v511, %v667
    %v680 = vsel %vm665, %v679, %v511
    %682 = vrot.lane.b32.xlu0 %v671, 32
    %v683 = vpop.permute.xlu0 %682
    %v685 = vsel %vm124, %v628, %v683
    %v686 = vpack.c.bf16 %v685, %v685
    %v688 = vsel %vm205, %v686, 0
    %690 = vmatpush.bf16.msra.mxu0 0
    %691 = vmatpush.bf16.msra.mxu0 0
    %692 = vmatpush.bf16.msra.mxu0 0
    %693 = vmatpush.bf16.msra.mxu0 0
    %694 = vmatpush.bf16.msra.mxu0 %v195
    %695 = vmatpush.bf16.msra.mxu0 %v193
    %696 = vmatpush.bf16.msra.mxu0 %v191
    %697 = vmatpush.bf16.msra.mxu0 %v189
    %698 = vmatmul.bf16.gmra.mxu0 %v688
    %v699 = vpop.f32.mrf.mxu0
    %v700 = vadd.f32 0.0, %v699
    %v701 = vpop.f32.mrf.mxu0
    %702 = vdwg.mxu0
    %703 = vmatpush.bf16.msra.mxu0 0
    %704 = vmatpush.bf16.msra.mxu0 0
    %705 = vmatpush.bf16.msra.mxu0 0
    %706 = vmatpush.bf16.msra.mxu0 0
    %707 = vmatpush.bf16.msra.mxu0 %v196
    %708 = vmatpush.bf16.msra.mxu0 %v194
    %709 = vmatpush.bf16.msra.mxu0 %v192
    %710 = vmatpush.bf16.msra.mxu0 %v190
    %711 = vmatmul.bf16.gmra.mxu0 %v688
    %v712 = vpop.f32.mrf.mxu0
    %v713 = vadd.f32 0.0, %v712
    %v714 = vpop.f32.mrf.mxu0
    %715 = vdwg.mxu0
    %v718 = vrot.slane %v700, 2
    %v719 = vrot.slane %v713, 2
    %v722 = vadd.f32 %v138, %v718
    %v723 = vadd.f32 %v371, %v719
    %v724 = vxor.u32 %v722, 2147483648
    %v725 = vxor.u32 %v723, 2147483648
    %v726 = vmul.f32 %v724, 1.442695
    %v727 = vpow.pop %v726
    %v728 = vmul.f32 %v725, 1.442695
    %v729 = vpow.pop %v728
    %v730 = vadd.f32 %v727, 1.0
    %v731 = vadd.f32 %v729, 1.0
    %v732 = vrcp.pop %v730
    %v733 = vmul.f32 %v730, %v732
    %v734 = vsub.f32 1.0, %v733
    %v735 = vmul.f32 %v732, %v734
    %v736 = vadd.f32 %v732, %v735
    %vm737 = vweird.f32 %v730
    %vm738 = vweird.f32 %v732
    %vm739 = vmor %vm737, %vm738
    %v740 = vsel %vm739, %v732, %v736
    %v741 = vand.u32 2147483647, %v730
    %vm742 = vcmp.eq.f32.partialorder %v741, 8.507059e+37
    %v743 = vand.u32 %v730, 2147483648
    %v744 = vor.u32 1.1754944e-38, %v743
    %v745 = vsel %vm742, %v744, %v740
    %v746 = vmul.f32 1.0, %v745
    %v747 = vrcp.pop %v731
    %v748 = vmul.f32 %v731, %v747
    %v749 = vsub.f32 1.0, %v748
    %v750 = vmul.f32 %v747, %v749
    %v751 = vadd.f32 %v747, %v750
    %vm752 = vweird.f32 %v731
    %vm753 = vweird.f32 %v747
    %vm754 = vmor %vm752, %vm753
    %v755 = vsel %vm754, %v747, %v751
    %v756 = vand.u32 2147483647, %v731
    %vm757 = vcmp.eq.f32.partialorder %v756, 8.507059e+37
    %v758 = vand.u32 %v731, 2147483648
    %v759 = vor.u32 1.1754944e-38, %v758
    %v760 = vsel %vm757, %v759, %v755
    %v761 = vmul.f32 1.0, %v760
    %v762 = vtanh.pop %v722
    %v763 = vtanh.pop %v723
    %v765 = vrot.slane %v634, 2
    %766 = vrot.lane.b32.xlu0 %v765, 32
    %v767 = vpop.permute.xlu0 %766
    %v769 = vmul.f32 %v746, %v767
    %771 = vrot.lane.b32.xlu0 %v762, 64
    %v772 = vpop.permute.xlu0 %771
    %v774 = vmul.f32 %v746, %v772
    %776 = vrot.lane.b32.xlu0 %v774, 32
    %v777 = vpop.permute.xlu0 %776
    %v779 = vadd.f32 %v769, %v777
    %v780 = vtanh.pop %v779
    %782 = vrot.lane.b32.xlu0 %v780, 64
    %v783 = vpop.permute.xlu0 %782
    %v785 = vmul.f32 %v746, %v783
    %vm786 = vcmp.gt.s32.totalorder %v85, 3
    %v787 = vsel %vm786, 1, 0
    %788 = vset.pattern.permute.xlu0 0
    %789 = vperm.xlu0 %788, %v787
    %v790 = vpop.permute.xlu0 %789
    %vm791 = vcmp.eq.s32.totalorder %v790, 1
    %v793 = vrot.slane %v785, 6
    %794 = vrot.lane.b32.xlu0 %v793, 32
    %v795 = vpop.permute.xlu0 %794
    %v797 = vsel %vm791, %v795, %v628
    %v799 = vrot.slane %v779, 6
    %800 = vrot.lane.b32.xlu0 %v799, 96
    %v801 = vpop.permute.xlu0 %800
    %v803 = vsel %vm791, %v801, %v634
    %v805 = vmax.f32 %v637, %v793
    %v806 = vsel %vm791, %v805, %v637
    %v808 = vrot.slane %v677, 2
    %809 = vrot.lane.b32.xlu0 %v808, 32
    %v810 = vpop.permute.xlu0 %809
    %v812 = vmul.f32 %v761, %v810
    %814 = vrot.lane.b32.xlu0 %v763, 64
    %v815 = vpop.permute.xlu0 %814
    %v817 = vmul.f32 %v761, %v815
    %819 = vrot.lane.b32.xlu0 %v817, 32
    %v820 = vpop.permute.xlu0 %819
    %v822 = vadd.f32 %v812, %v820
    %v823 = vtanh.pop %v822
    %825 = vrot.lane.b32.xlu0 %v823, 64
    %v826 = vpop.permute.xlu0 %825
    %v828 = vmul.f32 %v761, %v826
    %vm829 = vcmp.gt.s32.totalorder %v85, 4
    %v830 = vsel %vm829, 1, 0
    %831 = vset.pattern.permute.xlu0 0
    %832 = vperm.xlu0 %831, %v830
    %v833 = vpop.permute.xlu0 %832
    %vm834 = vcmp.eq.s32.totalorder %v833, 1
    %v836 = vrot.slane %v828, 6
    %837 = vrot.lane.b32.xlu0 %v836, 32
    %v838 = vpop.permute.xlu0 %837
    %v840 = vsel %vm834, %v838, %v671
    %v842 = vrot.slane %v822, 6
    %843 = vrot.lane.b32.xlu0 %v842, 96
    %v844 = vpop.permute.xlu0 %843
    %v846 = vsel %vm834, %v844, %v677
    %v848 = vmax.f32 %v680, %v836
    %v849 = vsel %vm834, %v848, %v680
    %851 = vrot.lane.b32.xlu0 %v840, 32
    %v852 = vpop.permute.xlu0 %851
    %v854 = vsel %vm124, %v797, %v852
    %v855 = vpack.c.bf16 %v854, %v854
    %v857 = vsel %vm205, %v855, 0
    %859 = vmatpush.bf16.msra.mxu0 0
    %860 = vmatpush.bf16.msra.mxu0 0
    %861 = vmatpush.bf16.msra.mxu0 0
    %862 = vmatpush.bf16.msra.mxu0 0
    %863 = vmatpush.bf16.msra.mxu0 %v195
    %864 = vmatpush.bf16.msra.mxu0 %v193
    %865 = vmatpush.bf16.msra.mxu0 %v191
    %866 = vmatpush.bf16.msra.mxu0 %v189
    %867 = vmatmul.bf16.gmra.mxu0 %v857
    %v868 = vpop.f32.mrf.mxu0
    %v869 = vadd.f32 0.0, %v868
    %v870 = vpop.f32.mrf.mxu0
    %871 = vdwg.mxu0
    %872 = vmatpush.bf16.msra.mxu0 0
    %873 = vmatpush.bf16.msra.mxu0 0
    %874 = vmatpush.bf16.msra.mxu0 0
    %875 = vmatpush.bf16.msra.mxu0 0
    %876 = vmatpush.bf16.msra.mxu0 %v196
    %877 = vmatpush.bf16.msra.mxu0 %v194
    %878 = vmatpush.bf16.msra.mxu0 %v192
    %879 = vmatpush.bf16.msra.mxu0 %v190
    %880 = vmatmul.bf16.gmra.mxu0 %v857
    %v881 = vpop.f32.mrf.mxu0
    %v882 = vadd.f32 0.0, %v881
    %v883 = vpop.f32.mrf.mxu0
    %884 = vdwg.mxu0
    %v886 = vrot.slane %v152, 6
    %v888 = vadd.f32 %v140, %v869
    %v889 = vadd.f32 %v886, %v882
    %v890 = vxor.u32 %v888, 2147483648
    %v891 = vxor.u32 %v889, 2147483648
    %v892 = vmul.f32 %v890, 1.442695
    %v893 = vpow.pop %v892
    %v894 = vmul.f32 %v891, 1.442695
    %v895 = vpow.pop %v894
    %v896 = vadd.f32 %v893, 1.0
    %v897 = vadd.f32 %v895, 1.0
    %v898 = vrcp.pop %v896
    %v899 = vmul.f32 %v896, %v898
    %v900 = vsub.f32 1.0, %v899
    %v901 = vmul.f32 %v898, %v900
    %v902 = vadd.f32 %v898, %v901
    %vm903 = vweird.f32 %v896
    %vm904 = vweird.f32 %v898
    %vm905 = vmor %vm903, %vm904
    %v906 = vsel %vm905, %v898, %v902
    %v907 = vand.u32 2147483647, %v896
    %vm908 = vcmp.eq.f32.partialorder %v907, 8.507059e+37
    %v909 = vand.u32 %v896, 2147483648
    %v910 = vor.u32 1.1754944e-38, %v909
    %v911 = vsel %vm908, %v910, %v906
    %v912 = vmul.f32 1.0, %v911
    %v913 = vrcp.pop %v897
    %v914 = vmul.f32 %v897, %v913
    %v915 = vsub.f32 1.0, %v914
    %v916 = vmul.f32 %v913, %v915
    %v917 = vadd.f32 %v913, %v916
    %vm918 = vweird.f32 %v897
    %vm919 = vweird.f32 %v913
    %vm920 = vmor %vm918, %vm919
    %v921 = vsel %vm920, %v913, %v917
    %v922 = vand.u32 2147483647, %v897
    %vm923 = vcmp.eq.f32.partialorder %v922, 8.507059e+37
    %v924 = vand.u32 %v897, 2147483648
    %v925 = vor.u32 1.1754944e-38, %v924
    %v926 = vsel %vm923, %v925, %v921
    %v927 = vmul.f32 1.0, %v926
    %v928 = vtanh.pop %v888
    %v929 = vtanh.pop %v889
    %931 = vrot.lane.b32.xlu0 %v803, 32
    %v932 = vpop.permute.xlu0 %931
    %v934 = vmul.f32 %v912, %v932
    %936 = vrot.lane.b32.xlu0 %v928, 64
    %v937 = vpop.permute.xlu0 %936
    %v939 = vmul.f32 %v912, %v937
    %941 = vrot.lane.b32.xlu0 %v939, 32
    %v942 = vpop.permute.xlu0 %941
    %v944 = vadd.f32 %v934, %v942
    %v945 = vtanh.pop %v944
    %947 = vrot.lane.b32.xlu0 %v945, 64
    %v948 = vpop.permute.xlu0 %947
    %v950 = vmul.f32 %v912, %v948
    %952 = vrot.lane.b32.xlu0 %v797, 96
    %v953 = vpop.permute.xlu0 %952
    %v955 = vsel %vm834, %v950, %v953
    %v956 = vsel %vm834, %v944, %v932
    %v957 = vmax.f32 %v806, %v950
    %v958 = vsel %vm834, %v957, %v806
    %960 = vrot.lane.b32.xlu0 %v846, 32
    %v961 = vpop.permute.xlu0 %960
    %v963 = vmul.f32 %v927, %v961
    %965 = vrot.lane.b32.xlu0 %v929, 64
    %v966 = vpop.permute.xlu0 %965
    %v968 = vmul.f32 %v927, %v966
    %970 = vrot.lane.b32.xlu0 %v968, 32
    %v971 = vpop.permute.xlu0 %970
    %v973 = vadd.f32 %v963, %v971
    %v974 = vtanh.pop %v973
    %976 = vrot.lane.b32.xlu0 %v974, 64
    %v977 = vpop.permute.xlu0 %976
    %v979 = vmul.f32 %v927, %v977
    %980 = vrot.lane.b32.xlu0 %v840, 96
    %v981 = vpop.permute.xlu0 %980
    %v983 = vsel %vm791, %v979, %v981
    %v984 = vsel %vm791, %v973, %v961
    %v985 = vmax.f32 %v849, %v979
    %v986 = vsel %vm791, %v985, %v849
    %988 = vrot.lane.b32.xlu0 %v955, 32
    %v989 = vpop.permute.xlu0 %988
    %992 = vrot.lane.b32.xlu0 %v983, 64
    %v993 = vpop.permute.xlu0 %992
    %v995 = vsel %vm124, %v989, %v993
    %v996 = vpack.c.bf16 %v995, %v995
    %v998 = vsel %vm205, %v996, 0
    %1000 = vmatpush.bf16.msra.mxu0 0
    %1001 = vmatpush.bf16.msra.mxu0 0
    %1002 = vmatpush.bf16.msra.mxu0 0
    %1003 = vmatpush.bf16.msra.mxu0 0
    %1004 = vmatpush.bf16.msra.mxu0 %v195
    %1005 = vmatpush.bf16.msra.mxu0 %v193
    %1006 = vmatpush.bf16.msra.mxu0 %v191
    %1007 = vmatpush.bf16.msra.mxu0 %v189
    %1008 = vmatmul.bf16.gmra.mxu0 %v998
    %v1009 = vpop.f32.mrf.mxu0
    %v1010 = vadd.f32 0.0, %v1009
    %v1011 = vpop.f32.mrf.mxu0
    %1012 = vdwg.mxu0
    %1013 = vmatpush.bf16.msra.mxu0 0
    %1014 = vmatpush.bf16.msra.mxu0 0
    %1015 = vmatpush.bf16.msra.mxu0 0
    %1016 = vmatpush.bf16.msra.mxu0 0
    %1017 = vmatpush.bf16.msra.mxu0 %v196
    %1018 = vmatpush.bf16.msra.mxu0 %v194
    %1019 = vmatpush.bf16.msra.mxu0 %v192
    %1020 = vmatpush.bf16.msra.mxu0 %v190
    %1021 = vmatmul.bf16.gmra.mxu0 %v998
    %v1022 = vpop.f32.mrf.mxu0
    %v1023 = vadd.f32 0.0, %v1022
    %v1024 = vpop.f32.mrf.mxu0
    %1025 = vdwg.mxu0
    %v1026 = vrot.slane %v152, 2
    %v1030 = vrot.slane %v1010, 6
    %v1031 = vrot.slane %v1023, 6
    %v1034 = vadd.f32 %v140, %v1030
    %v1035 = vadd.f32 %v1026, %v1031
    %v1036 = vxor.u32 %v1034, 2147483648
    %v1037 = vxor.u32 %v1035, 2147483648
    %v1038 = vmul.f32 %v1036, 1.442695
    %v1039 = vpow.pop %v1038
    %v1040 = vmul.f32 %v1037, 1.442695
    %v1041 = vpow.pop %v1040
    %v1042 = vadd.f32 %v1039, 1.0
    %v1043 = vadd.f32 %v1041, 1.0
    %v1044 = vrcp.pop %v1042
    %v1045 = vmul.f32 %v1042, %v1044
    %v1046 = vsub.f32 1.0, %v1045
    %v1047 = vmul.f32 %v1044, %v1046
    %v1048 = vadd.f32 %v1044, %v1047
    %vm1049 = vweird.f32 %v1042
    %vm1050 = vweird.f32 %v1044
    %vm1051 = vmor %vm1049, %vm1050
    %v1052 = vsel %vm1051, %v1044, %v1048
    %v1053 = vand.u32 2147483647, %v1042
    %vm1054 = vcmp.eq.f32.partialorder %v1053, 8.507059e+37
    %v1055 = vand.u32 %v1042, 2147483648
    %v1056 = vor.u32 1.1754944e-38, %v1055
    %v1057 = vsel %vm1054, %v1056, %v1052
    %v1058 = vmul.f32 1.0, %v1057
    %v1059 = vrcp.pop %v1043
    %v1060 = vmul.f32 %v1043, %v1059
    %v1061 = vsub.f32 1.0, %v1060
    %v1062 = vmul.f32 %v1059, %v1061
    %v1063 = vadd.f32 %v1059, %v1062
    %vm1064 = vweird.f32 %v1043
    %vm1065 = vweird.f32 %v1059
    %vm1066 = vmor %vm1064, %vm1065
    %v1067 = vsel %vm1066, %v1059, %v1063
    %v1068 = vand.u32 2147483647, %v1043
    %vm1069 = vcmp.eq.f32.partialorder %v1068, 8.507059e+37
    %v1070 = vand.u32 %v1043, 2147483648
    %v1071 = vor.u32 1.1754944e-38, %v1070
    %v1072 = vsel %vm1069, %v1071, %v1067
    %v1073 = vmul.f32 1.0, %v1072
    %v1074 = vtanh.pop %v1034
    %v1075 = vtanh.pop %v1035
    %v1077 = vrot.slane %v956, 6
    %v1079 = vmul.f32 %v1058, %v1077
    %1081 = vrot.lane.b32.xlu0 %v1074, 64
    %v1082 = vpop.permute.xlu0 %1081
    %v1084 = vmul.f32 %v1058, %v1082
    %1086 = vrot.lane.b32.xlu0 %v1084, 32
    %v1087 = vpop.permute.xlu0 %1086
    %v1089 = vadd.f32 %v1079, %v1087
    %v1090 = vtanh.pop %v1089
    %1092 = vrot.lane.b32.xlu0 %v1090, 64
    %v1093 = vpop.permute.xlu0 %1092
    %v1095 = vmul.f32 %v1058, %v1093
    %v1097 = vrot.slane %v1095, 2
    %1098 = vrot.lane.b32.xlu0 %v1097, 32
    %v1099 = vpop.permute.xlu0 %1098
    %v1101 = vsel %vm665, %v1099, %v989
    %v1103 = vrot.slane %v1089, 2
    %1104 = vrot.lane.b32.xlu0 %v1103, 96
    %v1105 = vpop.permute.xlu0 %1104
    %1107 = vrot.lane.b32.xlu0 %v956, 96
    %v1108 = vpop.permute.xlu0 %1107
    %v1110 = vsel %vm665, %v1105, %v1108
    %v1112 = vmax.f32 %v958, %v1097
    %v1113 = vsel %vm665, %v1112, %v958
    %v1115 = vrot.slane %v984, 6
    %v1117 = vmul.f32 %v1073, %v1115
    %1119 = vrot.lane.b32.xlu0 %v1075, 64
    %v1120 = vpop.permute.xlu0 %1119
    %v1122 = vmul.f32 %v1073, %v1120
    %1124 = vrot.lane.b32.xlu0 %v1122, 32
    %v1125 = vpop.permute.xlu0 %1124
    %v1127 = vadd.f32 %v1117, %v1125
    %v1128 = vtanh.pop %v1127
    %1130 = vrot.lane.b32.xlu0 %v1128, 64
    %v1131 = vpop.permute.xlu0 %1130
    %v1133 = vmul.f32 %v1073, %v1131
    %v1135 = vrot.slane %v1133, 2
    %1136 = vrot.lane.b32.xlu0 %v1135, 32
    %v1137 = vpop.permute.xlu0 %1136
    %1139 = vrot.lane.b32.xlu0 %v983, 32
    %v1140 = vpop.permute.xlu0 %1139
    %v1142 = vsel %vm622, %v1137, %v1140
    %v1144 = vrot.slane %v1127, 2
    %1145 = vrot.lane.b32.xlu0 %v1144, 96
    %v1146 = vpop.permute.xlu0 %1145
    %1148 = vrot.lane.b32.xlu0 %v984, 96
    %v1149 = vpop.permute.xlu0 %1148
    %v1151 = vsel %vm622, %v1146, %v1149
    %v1153 = vmax.f32 %v986, %v1135
    %v1154 = vsel %vm622, %v1153, %v986
    %1156 = vrot.lane.b32.xlu0 %v1142, 32
    %v1157 = vpop.permute.xlu0 %1156
    %v1159 = vsel %vm124, %v1101, %v1157
    %v1160 = vpack.c.bf16 %v1159, %v1159
    %v1162 = vsel %vm205, %v1160, 0
    %1164 = vmatpush.bf16.msra.mxu0 0
    %1165 = vmatpush.bf16.msra.mxu0 0
    %1166 = vmatpush.bf16.msra.mxu0 0
    %1167 = vmatpush.bf16.msra.mxu0 0
    %1168 = vmatpush.bf16.msra.mxu0 %v195
    %1169 = vmatpush.bf16.msra.mxu0 %v193
    %1170 = vmatpush.bf16.msra.mxu0 %v191
    %1171 = vmatpush.bf16.msra.mxu0 %v189
    %1172 = vmatmul.bf16.gmra.mxu0 %v1162
    %v1173 = vpop.f32.mrf.mxu0
    %v1174 = vadd.f32 0.0, %v1173
    %v1175 = vpop.f32.mrf.mxu0
    %1176 = vdwg.mxu0
    %1177 = vmatpush.bf16.msra.mxu0 0
    %1178 = vmatpush.bf16.msra.mxu0 0
    %1179 = vmatpush.bf16.msra.mxu0 0
    %1180 = vmatpush.bf16.msra.mxu0 0
    %1181 = vmatpush.bf16.msra.mxu0 %v196
    %1182 = vmatpush.bf16.msra.mxu0 %v194
    %1183 = vmatpush.bf16.msra.mxu0 %v192
    %1184 = vmatpush.bf16.msra.mxu0 %v190
    %1185 = vmatmul.bf16.gmra.mxu0 %v1162
    %v1186 = vpop.f32.mrf.mxu0
    %v1187 = vadd.f32 0.0, %v1186
    %v1188 = vpop.f32.mrf.mxu0
    %1189 = vdwg.mxu0
    %v1192 = vrot.slane %v1174, 4
    %v1193 = vrot.slane %v1187, 4
    %v1196 = vadd.f32 %v140, %v1192
    %v1197 = vadd.f32 %v886, %v1193
    %v1198 = vxor.u32 %v1196, 2147483648
    %v1199 = vxor.u32 %v1197, 2147483648
    %v1200 = vmul.f32 %v1198, 1.442695
    %v1201 = vpow.pop %v1200
    %v1202 = vmul.f32 %v1199, 1.442695
    %v1203 = vpow.pop %v1202
    %v1204 = vadd.f32 %v1201, 1.0
    %v1205 = vadd.f32 %v1203, 1.0
    %v1206 = vrcp.pop %v1204
    %v1207 = vmul.f32 %v1204, %v1206
    %v1208 = vsub.f32 1.0, %v1207
    %v1209 = vmul.f32 %v1206, %v1208
    %v1210 = vadd.f32 %v1206, %v1209
    %vm1211 = vweird.f32 %v1204
    %vm1212 = vweird.f32 %v1206
    %vm1213 = vmor %vm1211, %vm1212
    %v1214 = vsel %vm1213, %v1206, %v1210
    %v1215 = vand.u32 2147483647, %v1204
    %vm1216 = vcmp.eq.f32.partialorder %v1215, 8.507059e+37
    %v1217 = vand.u32 %v1204, 2147483648
    %v1218 = vor.u32 1.1754944e-38, %v1217
    %v1219 = vsel %vm1216, %v1218, %v1214
    %v1220 = vmul.f32 1.0, %v1219
    %v1221 = vrcp.pop %v1205
    %v1222 = vmul.f32 %v1205, %v1221
    %v1223 = vsub.f32 1.0, %v1222
    %v1224 = vmul.f32 %v1221, %v1223
    %v1225 = vadd.f32 %v1221, %v1224
    %vm1226 = vweird.f32 %v1205
    %vm1227 = vweird.f32 %v1221
    %vm1228 = vmor %vm1226, %vm1227
    %v1229 = vsel %vm1228, %v1221, %v1225
    %v1230 = vand.u32 2147483647, %v1205
    %vm1231 = vcmp.eq.f32.partialorder %v1230, 8.507059e+37
    %v1232 = vand.u32 %v1205, 2147483648
    %v1233 = vor.u32 1.1754944e-38, %v1232
    %v1234 = vsel %vm1231, %v1233, %v1229
    %v1235 = vmul.f32 1.0, %v1234
    %v1236 = vtanh.pop %v1196
    %v1237 = vtanh.pop %v1197
    %v1239 = vrot.slane %v1110, 4
    %1240 = vrot.lane.b32.xlu0 %v1239, 32
    %v1241 = vpop.permute.xlu0 %1240
    %v1243 = vmul.f32 %v1220, %v1241
    %1245 = vrot.lane.b32.xlu0 %v1236, 64
    %v1246 = vpop.permute.xlu0 %1245
    %v1248 = vmul.f32 %v1220, %v1246
    %1250 = vrot.lane.b32.xlu0 %v1248, 32
    %v1251 = vpop.permute.xlu0 %1250
    %v1253 = vadd.f32 %v1243, %v1251
    %v1254 = vtanh.pop %v1253
    %1256 = vrot.lane.b32.xlu0 %v1254, 64
    %v1257 = vpop.permute.xlu0 %1256
    %v1259 = vmul.f32 %v1220, %v1257
    %v1261 = vrot.slane %v1259, 4
    %1262 = vrot.lane.b32.xlu0 %v1261, 32
    %v1263 = vpop.permute.xlu0 %1262
    %v1265 = vsel %vm490, %v1263, %v1101
    %v1267 = vrot.slane %v1253, 4
    %1268 = vrot.lane.b32.xlu0 %v1267, 96
    %v1269 = vpop.permute.xlu0 %1268
    %v1271 = vsel %vm490, %v1269, %v1110
    %v1273 = vmax.f32 %v1113, %v1261
    %v1274 = vsel %vm490, %v1273, %v1113
    %v1276 = vrot.slane %v1151, 4
    %1277 = vrot.lane.b32.xlu0 %v1276, 32
    %v1278 = vpop.permute.xlu0 %1277
    %v1280 = vmul.f32 %v1235, %v1278
    %1282 = vrot.lane.b32.xlu0 %v1237, 64
    %v1283 = vpop.permute.xlu0 %1282
    %v1285 = vmul.f32 %v1235, %v1283
    %1287 = vrot.lane.b32.xlu0 %v1285, 32
    %v1288 = vpop.permute.xlu0 %1287
    %v1290 = vadd.f32 %v1280, %v1288
    %v1291 = vtanh.pop %v1290
    %1293 = vrot.lane.b32.xlu0 %v1291, 64
    %v1294 = vpop.permute.xlu0 %1293
    %v1296 = vmul.f32 %v1235, %v1294
    %v1298 = vrot.slane %v1296, 4
    %1299 = vrot.lane.b32.xlu0 %v1298, 32
    %v1300 = vpop.permute.xlu0 %1299
    %v1302 = vsel %vm446, %v1300, %v1142
    %v1304 = vrot.slane %v1290, 4
    %1305 = vrot.lane.b32.xlu0 %v1304, 96
    %v1306 = vpop.permute.xlu0 %1305
    %v1308 = vsel %vm446, %v1306, %v1151
    %v1310 = vmax.f32 %v1154, %v1298
    %v1311 = vsel %vm446, %v1310, %v1154
    %1313 = vrot.lane.b32.xlu0 %v1302, 32
    %v1314 = vpop.permute.xlu0 %1313
    %v1316 = vsel %vm124, %v1265, %v1314
    %v1317 = vpack.c.bf16 %v1316, %v1316
    %v1319 = vsel %vm205, %v1317, 0
    %1321 = vmatpush.bf16.msra.mxu0 0
    %1322 = vmatpush.bf16.msra.mxu0 0
    %1323 = vmatpush.bf16.msra.mxu0 0
    %1324 = vmatpush.bf16.msra.mxu0 0
    %1325 = vmatpush.bf16.msra.mxu0 %v195
    %1326 = vmatpush.bf16.msra.mxu0 %v193
    %1327 = vmatpush.bf16.msra.mxu0 %v191
    %1328 = vmatpush.bf16.msra.mxu0 %v189
    %1329 = vmatmul.bf16.gmra.mxu0 %v1319
    %v1330 = vpop.f32.mrf.mxu0
    %v1331 = vadd.f32 0.0, %v1330
    %v1332 = vpop.f32.mrf.mxu0
    %1333 = vdwg.mxu0
    %1334 = vmatpush.bf16.msra.mxu0 0
    %1335 = vmatpush.bf16.msra.mxu0 0
    %1336 = vmatpush.bf16.msra.mxu0 0
    %1337 = vmatpush.bf16.msra.mxu0 0
    %1338 = vmatpush.bf16.msra.mxu0 %v196
    %1339 = vmatpush.bf16.msra.mxu0 %v194
    %1340 = vmatpush.bf16.msra.mxu0 %v192
    %1341 = vmatpush.bf16.msra.mxu0 %v190
    %1342 = vmatmul.bf16.gmra.mxu0 %v1319
    %v1343 = vpop.f32.mrf.mxu0
    %v1344 = vadd.f32 0.0, %v1343
    %v1345 = vpop.f32.mrf.mxu0
    %1346 = vdwg.mxu0
    %v1349 = vrot.slane %v1331, 2
    %v1350 = vrot.slane %v1344, 2
    %v1353 = vadd.f32 %v140, %v1349
    %v1354 = vadd.f32 %v1026, %v1350
    %v1355 = vxor.u32 %v1353, 2147483648
    %v1356 = vxor.u32 %v1354, 2147483648
    %v1357 = vmul.f32 %v1355, 1.442695
    %v1358 = vpow.pop %v1357
    %v1359 = vmul.f32 %v1356, 1.442695
    %v1360 = vpow.pop %v1359
    %v1361 = vadd.f32 %v1358, 1.0
    %v1362 = vadd.f32 %v1360, 1.0
    %v1363 = vrcp.pop %v1361
    %v1364 = vmul.f32 %v1361, %v1363
    %v1365 = vsub.f32 1.0, %v1364
    %v1366 = vmul.f32 %v1363, %v1365
    %v1367 = vadd.f32 %v1363, %v1366
    %vm1368 = vweird.f32 %v1361
    %vm1369 = vweird.f32 %v1363
    %vm1370 = vmor %vm1368, %vm1369
    %v1371 = vsel %vm1370, %v1363, %v1367
    %v1372 = vand.u32 2147483647, %v1361
    %vm1373 = vcmp.eq.f32.partialorder %v1372, 8.507059e+37
    %v1374 = vand.u32 %v1361, 2147483648
    %v1375 = vor.u32 1.1754944e-38, %v1374
    %v1376 = vsel %vm1373, %v1375, %v1371
    %v1377 = vmul.f32 1.0, %v1376
    %v1378 = vrcp.pop %v1362
    %v1379 = vmul.f32 %v1362, %v1378
    %v1380 = vsub.f32 1.0, %v1379
    %v1381 = vmul.f32 %v1378, %v1380
    %v1382 = vadd.f32 %v1378, %v1381
    %vm1383 = vweird.f32 %v1362
    %vm1384 = vweird.f32 %v1378
    %vm1385 = vmor %vm1383, %vm1384
    %v1386 = vsel %vm1385, %v1378, %v1382
    %v1387 = vand.u32 2147483647, %v1362
    %vm1388 = vcmp.eq.f32.partialorder %v1387, 8.507059e+37
    %v1389 = vand.u32 %v1362, 2147483648
    %v1390 = vor.u32 1.1754944e-38, %v1389
    %v1391 = vsel %vm1388, %v1390, %v1386
    %v1392 = vmul.f32 1.0, %v1391
    %v1393 = vtanh.pop %v1353
    %v1394 = vtanh.pop %v1354
    %v1396 = vrot.slane %v1271, 2
    %1397 = vrot.lane.b32.xlu0 %v1396, 32
    %v1398 = vpop.permute.xlu0 %1397
    %v1400 = vmul.f32 %v1377, %v1398
    %1402 = vrot.lane.b32.xlu0 %v1393, 64
    %v1403 = vpop.permute.xlu0 %1402
    %v1405 = vmul.f32 %v1377, %v1403
    %1407 = vrot.lane.b32.xlu0 %v1405, 32
    %v1408 = vpop.permute.xlu0 %1407
    %v1410 = vadd.f32 %v1400, %v1408
    %v1411 = vtanh.pop %v1410
    %1413 = vrot.lane.b32.xlu0 %v1411, 64
    %v1414 = vpop.permute.xlu0 %1413
    %v1416 = vmul.f32 %v1377, %v1414
    %v1418 = vrot.slane %v1416, 6
    %v1420 = vmax.f32 %v1274, %v1418
    %v1421 = vsel %vm328, %v1420, %v1274
    %v1423 = vrot.slane %v1308, 2
    %1424 = vrot.lane.b32.xlu0 %v1423, 32
    %v1425 = vpop.permute.xlu0 %1424
    %v1427 = vmul.f32 %v1392, %v1425
    %1429 = vrot.lane.b32.xlu0 %v1394, 64
    %v1430 = vpop.permute.xlu0 %1429
    %v1432 = vmul.f32 %v1392, %v1430
    %1434 = vrot.lane.b32.xlu0 %v1432, 32
    %v1435 = vpop.permute.xlu0 %1434
    %v1437 = vadd.f32 %v1427, %v1435
    %v1438 = vtanh.pop %v1437
    %1440 = vrot.lane.b32.xlu0 %v1438, 64
    %v1441 = vpop.permute.xlu0 %1440
    %v1443 = vmul.f32 %v1392, %v1441
    %v1445 = vrot.slane %v1443, 6
    %v1447 = vmax.f32 %v1311, %v1445
    %v1448 = vsel %vm302, %v1447, %v1311
    %v1449 = vstv %s86
    %vm1450 = vcmp.lt.s32.totalorder %v85, %v1449
    %v1451 = vmax.f32 %v1421, 0.0
    %v1452 = vsel %vm1450, 1, 0
    %1453 = vset.pattern.permute.xlu0 0
    %1454 = vperm.xlu0 %1453, %v1452
    %v1455 = vpop.permute.xlu0 %1454
    %vm1456 = vcmp.eq.s32.totalorder %v1455, 1
    %v1457 = vsel %vm1456, %v1451, %v1421
    %v1458 = vmax.f32 %v1448, 0.0
    %v1459 = vsel %vm1456, %v1458, %v1448
    %1461 = vrot.lane.b32.xlu0 %v1457, 32
    %v1462 = vpop.permute.xlu0 %1461
    %1465 = vrot.lane.b32.xlu0 %v1459, 64
    %v1466 = vpop.permute.xlu0 %1465
    %v1468 = vsel %vm124, %v1462, %v1466
    %v1469 = vpack.c.bf16 %v1468, %v1468
    %v1470 = vld [vmem:[#allocation8] sm:$0xf]
    %v1471 = vld [vmem:[#allocation8 + $0x4] sm:$0xf]
    %v1472 = vld [vmem:[#allocation8 + $0x8] sm:$0xf]
    %v1473 = vld [vmem:[#allocation8 + $0xc] sm:$0xf]
    %v1474 = vld [vmem:[#allocation8 + $0x10] sm:$0xf]
    %v1475 = vld [vmem:[#allocation8 + $0x14] sm:$0xf]
    %v1476 = vld [vmem:[#allocation8 + $0x18] sm:$0xf]
    %v1477 = vld [vmem:[#allocation8 + $0x1c] sm:$0xf]
    %v1478 = vld [vmem:[%s7] sm:$0x1]
    %v1480 = vperm.slane %v1478, 0
    %v1490 = vunpack.c.l.b16 %v1470
    %v1491 = vunpack.c.l.b16 %v1471
    %v1492 = vunpack.c.l.b16 %v1472
    %v1493 = vunpack.c.l.b16 %v1473
    %v1494 = vunpack.c.l.b16 %v1474
    %v1495 = vunpack.c.l.b16 %v1475
    %v1496 = vunpack.c.l.b16 %v1476
    %v1497 = vunpack.c.l.b16 %v1477
    %v1498 = vpack.c.b16 %v1491, %v1490
    %v1499 = vpack.c.b16 %v1493, %v1492
    %v1500 = vpack.c.b16 %v1495, %v1494
    %v1501 = vpack.c.b16 %v1497, %v1496
    %v1507 = vsel %vm205, %v1469, 0
    %1509 = vmatpush.bf16.msra.mxu0 0
    %1510 = vmatpush.bf16.msra.mxu0 0
    %1511 = vmatpush.bf16.msra.mxu0 0
    %1512 = vmatpush.bf16.msra.mxu0 0
    %1513 = vmatpush.bf16.msra.mxu0 %v1501
    %1514 = vmatpush.bf16.msra.mxu0 %v1500
    %1515 = vmatpush.bf16.msra.mxu0 %v1499
    %1516 = vmatpush.bf16.msra.mxu0 %v1498
    %1517 = vmatmul.bf16.gmra.mxu0 %v1507
    %v1518 = vpop.f32.mrf.mxu0
    %v1519 = vadd.f32 %v1480, %v1518
    %v1520 = vpop.f32.mrf.mxu0
    %1521 = vdwg.mxu0
    %v1522 = vmax.f32 %v1519, 0.0
    %v1523 = vld [vmem:[%s8] sm:$0xff]
    %v1524 = vld [vmem:[%s8 + $0x8] sm:$0xff]
    %v1525 = vld [vmem:[%s8 + $0x10] sm:$0xff]
    %v1526 = vld [vmem:[%s8 + $0x18] sm:$0xff]
    %v1527 = vld [vmem:[%s8 + $0x20] sm:$0xff]
    %v1528 = vld [vmem:[%s8 + $0x28] sm:$0xff]
    %v1529 = vld [vmem:[%s8 + $0x30] sm:$0xff]
    %v1530 = vld [vmem:[%s8 + $0x38] sm:$0xff]
    %v1531 = vld [vmem:[%s9] sm:$0x1]
    %v1533 = vperm.slane %v1531, 0
    %v1536 = vsel %vm205, %v1522, 0
    %1538 = vmatpush.msra.mxu0 0.0
    %1539 = vmatpush.msra.mxu0 0.0
    %1540 = vmatpush.msra.mxu0 0.0
    %1541 = vmatpush.msra.mxu0 0.0
    %1542 = vmatpush.msra.mxu0 0.0
    %1543 = vmatpush.msra.mxu0 0.0
    %1544 = vmatpush.msra.mxu0 0.0
    %1545 = vmatpush.msra.mxu0 0.0
    %1546 = vmatpush.msra.mxu0 %v1530
    %1547 = vmatpush.msra.mxu0 %v1529
    %1548 = vmatpush.msra.mxu0 %v1528
    %1549 = vmatpush.msra.mxu0 %v1527
    %1550 = vmatpush.msra.mxu0 %v1526
    %1551 = vmatpush.msra.mxu0 %v1525
    %1552 = vmatpush.msra.mxu0 %v1524
    %1553 = vmatpush.msra.mxu0 %v1523
    %1554 = vmatmul.f32.gmra.mxu0 %v1536
    %v1555 = vpop.f32.mrf.mxu0
    %v1556 = vadd.f32 %v1533, %v1555
    %1557 = vdwg.mxu0
    %vm1558 = vcmask 25600
    %v1559 = vsel %vm1558, %v1556, -inf
    %1560 = vmax.xlane.f32.xlu0 %v1559
    %v1561 = vpop.xlane.xlu0 %1560
    %v1562 = vsub.f32 %v1556, %v1561
    %v1563 = vmul.f32 %v1562, 1.442695
    %v1564 = vpow.pop %v1563
    %v1565 = vsel %vm1558, %v1564, 0.0
    %1566 = vadd.xlane.f32.xlu0 %v1565
    %v1567 = vpop.xlane.xlu0 %1566
    %v1568 = vlog2.pop %v1567
    %v1569 = vmul.f32 %v1568, 0.6931472
    %v1570 = vadd.f32 %v1569, %v1561
    %v1571 = vsub.f32 %v1556, %v1570
    %1572 = vst.msk [vmem:[#allocation9] sm:$0x3] %vm1558, %v1571
    // Predicated region
    $region54: #{tpu_custom_call.1} parent=1 // pred_check
      _
    $region55: #{tpu_custom_call.1} parent=1 // pred_check_branch
      %1574 = sbr.rel (0) target = $region57
    $region56: #{tpu_custom_call.1} parent=1 // pred_region
      %1576 = vsyncadd [#allocation5], 0
      %s1578 = sshll.u32 [#allocation9], 4
      %s1579 = int_to_ptr.vmem [resolvable:$true] %s1578
      %s1580 = sshll.u32 %s10, 4
      %s1581 = int_to_ptr.hbm [resolvable:$true] %s1580
      %1583 = dma.vmem_to_hbm [thread:$0]  %s1579, 32, %s1581, [#allocation5]
    $region57: #{tpu_custom_call.1} parent=1 // pred_fallthru
      _
    // Predicated region
    $region58: #{tpu_custom_call.1} parent=1 // pred_check
      _
    $region59: #{tpu_custom_call.1} parent=1 // pred_check_branch
      %1585 = sbr.rel (0) target = $region61
    $region60: #{tpu_custom_call.1} parent=1 // pred_region
      %1587 = dma.done [#allocation5], 32
    $region61: #{tpu_custom_call.1} parent=1 // pred_fallthru
      _
    %1588 = vsyncpa [#allocation4], 1
    %1589 = vsyncpa [#allocation7], 1
    %1590 = vsyncpa [#allocation5], 1

</llo_original>
